<compile_context>
chip_gen: v7x
topology: tpu7x:2x2x1
jax: 0.10.0
libtpu: 0.0.40
codegen_flags: <defaults>
</compile_context>

<pallas_src>
import functools

import jax
import jax.numpy as jnp
from jax.experimental import pallas as pl
from jax.experimental.pallas import tpu as pltpu


def _pick_batch_block(N, P, row_cap=1024):
    """Batch elements per grid step.

    Prefer fat steps (M = bN*P rows toward the MXU row dimension) but keep at
    least 2 grid steps when the batch allows it, so the "parallel" batch axis
    still splits across both TensorCores on v7x.  On v5e/v6e (1 TC) the
    annotation is a no-op and the heuristic just maximizes the block.
    """
    divisors = [b for b in range(1, N + 1) if N % b == 0]
    fitting = [b for b in divisors if b * P <= row_cap] or [1]
    multi_step = [b for b in fitting if N // b >= 2]
    return max(multi_step) if multi_step else max(fitting)


def _make_fused_conv_kernel(bN, H, W, Cin, Cmid, Cout, sh, sw, add_bias):
    """Builds the fused conv2(conv1(x)) kernel body for bN batch elements."""
    H2, W2 = H // sh, W // sw          # spatial size after conv1 (and conv2)
    P = H2 * W2                        # output pixels per batch element
    M = bN * P                         # matmul rows per grid step

    def zero_halo(xbuf, s_h, s_w, cin):
        # Only the 1-pixel halo needs zeros; the interior is fully overwritten
        # each step.  Per-step on purpose (each TC has its own scratch under
        # the "parallel" batch axis, so a program_id==0 guard would be wrong).
        xbuf[:, 0:1] = jnp.zeros((bN, 1, s_h, W2 + 2, s_w * cin), xbuf.dtype)
        xbuf[:, H2 + 1:H2 + 2] = jnp.zeros((bN, 1, s_h, W2 + 2, s_w * cin), xbuf.dtype)
        xbuf[:, :, :, 0:1] = jnp.zeros((bN, H2 + 2, s_h, 1, s_w * cin), xbuf.dtype)
        xbuf[:, :, :, W2 + 1:W2 + 2] = jnp.zeros((bN, H2 + 2, s_h, 1, s_w * cin), xbuf.dtype)

    def conv3x3(xbuf, w_ref, b_ref, cin, cout, s_h, s_w):
        """3x3 'same' conv as a single im2col matmul over a zero-halo,
        phase-grouped VMEM buffer.

        xbuf : Ref (bN, H2+2, s_h, W2+2, s_w*cin)
               element [b, gh, rh, gw, rw*cin + c] holds padded-input pixel
               (row gh*s_h + rh - s_h, col gw*s_w + rw - s_w, channel c) of
               batch element b; groups 0 / last along each axis are the halo.
        w_ref: Ref (9*cin, cout) bf16, rows tap-major (tap = kh*3 + kw).
        b_ref: Ref (1, cout) f32.
        Returns the (bN*P, cout) float32 result.
        """
        cols = []
        for kh in range(3):
            ch = kh + s_h - 1                       # row offset incl. top pad
            # Contiguous row-group slice + static phase index: the strided row
            # set {kh - 1 + ho*s_h} with no strided loads.
            rows = xbuf[:, ch // s_h:ch // s_h + H2, ch % s_h]   # (bN,H2,W2+2,s_w*cin)
            for kw in range(3):
                cw = kw + s_w - 1                   # col offset incl. left pad
                g0, r = cw // s_w, cw % s_w
                # Contiguous sublane slice + contiguous lane slice.
                patch = rows[:, :, g0:g0 + W2, r * cin:(r + 1) * cin]  # (bN,H2,W2,cin)
                cols.append(patch.reshape(M, cin))
        # One im2col slab -> ONE MXU matmul per conv (K = 9*cin) instead of
        # nine tiny dots + eight f32 VPU accumulator adds.
        slab = jnp.concatenate(cols, axis=-1).astype(jnp.bfloat16)     # (M, 9*cin)
        acc = jnp.dot(slab, w_ref[...], preferred_element_type=jnp.float32)
        if add_bias:
            acc = acc + b_ref[...]                  # (M, cout) + (1, cout)
        return acc

    def kernel(x_ref, w1_ref, b1_ref, w2_ref, b2_ref, o_ref, xbuf1, xbuf2):
        # ---- conv1 (stride folded into the tap indexing) ----
        zero_halo(xbuf1, sh, sw, Cin)
        # x block: (bN, H, W2, sw*Cin).  Splitting the row dim into (H2, sh)
        # groups is a leading-dim reshape (free); drop it into the interior.
        xbuf1[:, 1:1 + H2, :, 1:1 + W2, :] = (
            x_ref[...].reshape(bN, H2, sh, W2, sw * Cin))
        acc1 = conv3x3(xbuf1, w1_ref, b1_ref, Cin, Cmid, sh, sw)       # (M, Cmid)

        # ---- conv2 (stride 1); the intermediate never leaves VMEM ----
        zero_halo(xbuf2, 1, 1, Cmid)
        xbuf2[:, 1:1 + H2, :, 1:1 + W2, :] = acc1.reshape(bN, H2, 1, W2, Cmid)
        acc2 = conv3x3(xbuf2, w2_ref, b2_ref, Cmid, Cout, 1, 1)        # (M, Cout)

        # Channels-major store per batch element: (Cout, H2*W2) slabs, so the
        # wrapper reaches NCHW with a free reshape (no HBM transpose pass).
        for b in range(bN):                                            # static loop
            o_ref[b] = acc2[b * P:(b + 1) * P, :].T.astype(o_ref.dtype)

    return kernel


@functools.partial(jax.jit, static_argnames=("stride", "use_bias"))
def fused_conv_forward(x_nchw, w1_k, b1_k, w2_k, b2_k, *, stride, use_bias):
    """conv2(conv1(x)) with a single fused Pallas kernel. x is NCHW."""
    N, Cin, H, W = x_nchw.shape
    sh, sw = stride
    # TODO(synk): non-divisible spatial/stride combos would need partial phase
    # groups (or wrapper-side padding); the module's natural use is divisible.
    assert H % sh == 0 and W % sw == 0, "spatial dims must be divisible by stride"
    Cmid, Cout = w1_k.shape[-1], w2_k.shape[-1]
    H2, W2 = H // sh, W // sw
    P = H2 * W2

    bN = _pick_batch_block(N, P)
    grid = (N // bN,)

    # NCHW -> NHWC (one small transpose), then a *free* reshape grouping sw
    # adjacent columns into lanes so the strided column taps become contiguous
    # lane slices inside the kernel.
    xg = jnp.transpose(x_nchw, (0, 2, 3, 1)).reshape(N, H, W2, sw * Cin)

    kernel = _make_fused_conv_kernel(bN, H, W, Cin, Cmid, Cout, sh, sw, use_bias)

    out = pl.pallas_call(
        kernel,
        out_shape=jax.ShapeDtypeStruct((N, Cout, P), x_nchw.dtype),
        grid_spec=pltpu.PrefetchScalarGridSpec(
            num_scalar_prefetch=0,
            grid=grid,
            in_specs=[
                pl.BlockSpec((bN, H, W2, sw * Cin), lambda n: (n, 0, 0, 0)),
                pl.BlockSpec((9 * Cin, Cmid), lambda n: (0, 0)),
                pl.BlockSpec((1, Cmid), lambda n: (0, 0)),
                pl.BlockSpec((9 * Cmid, Cout), lambda n: (0, 0)),
                pl.BlockSpec((1, Cout), lambda n: (0, 0)),
            ],
            out_specs=pl.BlockSpec((bN, Cout, P), lambda n: (n, 0, 0)),
            scratch_shapes=[
                # conv1 padded, phase-grouped input (bN batch elements)
                pltpu.VMEM((bN, H2 + 2, sh, W2 + 2, sw * Cin), jnp.float32),
                # conv1 -> conv2 padded intermediate
                pltpu.VMEM((bN, H2 + 2, 1, W2 + 2, Cmid), jnp.float32),
            ],
        ),
        compiler_params=pltpu.CompilerParams(
            dimension_semantics=("parallel",)),
    )(xg, w1_k, b1_k, w2_k, b2_k)

    # (N, Cout, H2*W2) is already channel-major: reshape to NCHW is free.
    return out.reshape(N, Cout, H2, W2)


class ConvPallas:
    """Pallas port of the PyTorch `conv` module: conv2(conv1(x))."""

    def __init__(self, input_shape, output_shape, mid_channels, use_bias, key):
        c_in, h_in, w_in = input_shape
        c_out, h_out, w_out = output_shape
        self.stride1 = (h_in // h_out, w_in // w_out)
        self.use_bias = use_bias

        k1, k2, k3, k4 = jax.random.split(key, 4)

        def init_w(k, o, i):
            bound = 1.0 / float((i * 9) ** 0.5)
            return jax.random.uniform(k, (o, i, 3, 3), jnp.float32, -bound, bound)

        def init_b(k, o, i):
            if not use_bias:
                return jnp.zeros((o,), jnp.float32)
            bound = 1.0 / float((i * 9) ** 0.5)
            return jax.random.uniform(k, (o,), jnp.float32, -bound, bound)

        # PyTorch-layout parameters (kept for the pure-JAX reference check).
        self.w1_oihw = init_w(k1, mid_channels, c_in)
        self.b1 = init_b(k2, mid_channels, c_in)
        self.w2_oihw = init_w(k3, c_out, mid_channels)
        self.b2 = init_b(k4, c_out, mid_channels)

        # Kernel-ready layouts, precomputed ONCE here (not per forward call):
        # OIHW -> tap-major flattened (9*Cin, Cout) im2col weights in bf16
        # (MXU-native operands; accumulation stays f32), 2-D f32 bias rows.
        def prep_w(w_oihw):
            o, i, _, _ = w_oihw.shape
            # rows ordered (kh*3 + kw)*i + c_in to match the im2col slab.
            return (jnp.transpose(w_oihw, (2, 3, 1, 0))
                    .reshape(9 * i, o).astype(jnp.bfloat16))

        self.w1_k = prep_w(self.w1_oihw)
        self.w2_k = prep_w(self.w2_oihw)
        self.b1_k = self.b1.reshape(1, mid_channels)
        self.b2_k = self.b2.reshape(1, c_out)

    def __call__(self, x_nchw):
        return fused_conv_forward(x_nchw, self.w1_k, self.b1_k,
                                  self.w2_k, self.b2_k,
                                  stride=self.stride1, use_bias=self.use_bias)


def _conv_ref(x_nchw, w_oihw, b, stride):
    out = jax.lax.conv_general_dilated(
        x_nchw, w_oihw, window_strides=stride, padding=[(1, 1), (1, 1)],
        dimension_numbers=("NCHW", "OIHW", "NCHW"))
    return out + b[None, :, None, None]


if __name__ == "__main__":
    input_shape = (4, 16, 16)    # (C, H, W) as seen by the PyTorch module
    output_shape = (8, 8, 8)     # (C, H, W) -> conv1 stride = (2, 2)
    mid_channels = 8
    use_bias = True
    batch = 2

    key = jax.random.PRNGKey(0)
    kx, kp = jax.random.split(key)
    x = jax.random.normal(kx, (batch,) + input_shape, jnp.float32)

    model = ConvPallas(input_shape, output_shape, mid_channels, use_bias, kp)
    out = jax.block_until_ready(model(x))

    # Pure-JAX f32 reference of the same two-conv forward pass.
    ref1 = _conv_ref(x, model.w1_oihw, model.b1, model.stride1)
    ref = _conv_ref(ref1, model.w2_oihw, model.b2, (1, 1))

    assert out.shape == (batch,) + output_shape
    # Tolerance relaxed (vs 1e-4) because the kernel feeds the MXU bf16
    # operands (f32 accumulation); expected error is well under 1e-2.
    assert jnp.allclose(out, ref, atol=2e-2, rtol=2e-2), "mismatch vs reference"

    print("KERNEL_OK")
</pallas_src>

<mosaic_0001>
module attributes {stable_mosaic.version = 11 : i64} {
  func.func @kernel(%arg0: i32, %arg1: memref<1x16x8x8xf32, #tpu.memory_space<vmem>>, %arg2: memref<36x8xbf16, #tpu.memory_space<vmem>>, %arg3: memref<1x8xf32, #tpu.memory_space<vmem>>, %arg4: memref<72x8xbf16, #tpu.memory_space<vmem>>, %arg5: memref<1x8xf32, #tpu.memory_space<vmem>>, %arg6: memref<1x8x64xf32, #tpu.memory_space<vmem>>, %arg7: memref<1x10x2x10x8xf32, #tpu.memory_space<vmem>>, %arg8: memref<1x10x1x10x8xf32, #tpu.memory_space<vmem>>) attributes {dimension_semantics = [#tpu.dimension_semantics<parallel>], iteration_bounds = array<i64: 2>, scalar_prefetch = 0 : i64, scratch_operands = 2 : i64, tpu.core_type = #tpu.core_type<tc>, window_params = [{transform_indices = @transform_0, window_bounds = array<i64: 1, 16, 8, 8>}, {pipeline_mode = #tpu.pipeline_mode<synchronous>, transform_indices = @transform_1, window_bounds = array<i64: 36, 8>}, {pipeline_mode = #tpu.pipeline_mode<synchronous>, transform_indices = @transform_2, window_bounds = array<i64: 1, 8>}, {pipeline_mode = #tpu.pipeline_mode<synchronous>, transform_indices = @transform_3, window_bounds = array<i64: 72, 8>}, {pipeline_mode = #tpu.pipeline_mode<synchronous>, transform_indices = @transform_4, window_bounds = array<i64: 1, 8>}, {transform_indices = @transform_5, window_bounds = array<i64: 1, 8, 64>}]} {
    %cst = arith.constant 0.000000e+00 : f32
    %0 = vector.broadcast %cst : f32 to vector<1x1x2x10x8xf32>
    %c0 = arith.constant 0 : index
    %c0_0 = arith.constant 0 : index
    %c0_1 = arith.constant 0 : index
    %c0_2 = arith.constant 0 : index
    %c0_3 = arith.constant 0 : index
    %1 = vector.load %arg7[%c0, %c0_0, %c0_1, %c0_2, %c0_3] : memref<1x10x2x10x8xf32, #tpu.memory_space<vmem>>, vector<1x1x2x10x8xf32>
    tpu.vector_store %arg7[%c0, %c0_0, %c0_1, %c0_2, %c0_3], %0 {strides = array<i32>} : memref<1x10x2x10x8xf32, #tpu.memory_space<vmem>>, vector<1x1x2x10x8xf32>,
    %cst_4 = arith.constant 0.000000e+00 : f32
    %2 = vector.broadcast %cst_4 : f32 to vector<1x1x2x10x8xf32>
    %c0_5 = arith.constant 0 : index
    %c9 = arith.constant 9 : index
    %c0_6 = arith.constant 0 : index
    %c0_7 = arith.constant 0 : index
    %c0_8 = arith.constant 0 : index
    %3 = vector.load %arg7[%c0_5, %c9, %c0_6, %c0_7, %c0_8] : memref<1x10x2x10x8xf32, #tpu.memory_space<vmem>>, vector<1x1x2x10x8xf32>
    tpu.vector_store %arg7[%c0_5, %c9, %c0_6, %c0_7, %c0_8], %2 {strides = array<i32>} : memref<1x10x2x10x8xf32, #tpu.memory_space<vmem>>, vector<1x1x2x10x8xf32>,
    %cst_9 = arith.constant 0.000000e+00 : f32
    %4 = vector.broadcast %cst_9 : f32 to vector<1x10x2x1x8xf32>
    %c0_10 = arith.constant 0 : index
    %c0_11 = arith.constant 0 : index
    %c0_12 = arith.constant 0 : index
    %c0_13 = arith.constant 0 : index
    %c0_14 = arith.constant 0 : index
    %5 = vector.load %arg7[%c0_10, %c0_11, %c0_12, %c0_13, %c0_14] : memref<1x10x2x10x8xf32, #tpu.memory_space<vmem>>, vector<1x10x2x1x8xf32>
    tpu.vector_store %arg7[%c0_10, %c0_11, %c0_12, %c0_13, %c0_14], %4 {strides = array<i32>} : memref<1x10x2x10x8xf32, #tpu.memory_space<vmem>>, vector<1x10x2x1x8xf32>,
    %cst_15 = arith.constant 0.000000e+00 : f32
    %6 = vector.broadcast %cst_15 : f32 to vector<1x10x2x1x8xf32>
    %c0_16 = arith.constant 0 : index
    %c0_17 = arith.constant 0 : index
    %c0_18 = arith.constant 0 : index
    %c9_19 = arith.constant 9 : index
    %c0_20 = arith.constant 0 : index
    %7 = vector.load %arg7[%c0_16, %c0_17, %c0_18, %c9_19, %c0_20] : memref<1x10x2x10x8xf32, #tpu.memory_space<vmem>>, vector<1x10x2x1x8xf32>
    tpu.vector_store %arg7[%c0_16, %c0_17, %c0_18, %c9_19, %c0_20], %6 {strides = array<i32>} : memref<1x10x2x10x8xf32, #tpu.memory_space<vmem>>, vector<1x10x2x1x8xf32>,
    %c0_21 = arith.constant 0 : index
    %c0_22 = arith.constant 0 : index
    %c0_23 = arith.constant 0 : index
    %c0_24 = arith.constant 0 : index
    %8 = vector.load %arg1[%c0_21, %c0_22, %c0_23, %c0_24] : memref<1x16x8x8xf32, #tpu.memory_space<vmem>>, vector<1x16x8x8xf32>
    %9 = vector.shape_cast %8 : vector<1x16x8x8xf32> to vector<1x8x2x8x8xf32>
    %c0_25 = arith.constant 0 : index
    %c1 = arith.constant 1 : index
    %c0_26 = arith.constant 0 : index
    %c1_27 = arith.constant 1 : index
    %c0_28 = arith.constant 0 : index
    %10 = vector.load %arg7[%c0_25, %c1, %c0_26, %c1_27, %c0_28] : memref<1x10x2x10x8xf32, #tpu.memory_space<vmem>>, vector<1x8x2x8x8xf32>
    tpu.vector_store %arg7[%c0_25, %c1, %c0_26, %c1_27, %c0_28], %9 {strides = array<i32>} : memref<1x10x2x10x8xf32, #tpu.memory_space<vmem>>, vector<1x8x2x8x8xf32>,
    %c0_29 = arith.constant 0 : index
    %c0_30 = arith.constant 0 : index
    %c1_31 = arith.constant 1 : index
    %c0_32 = arith.constant 0 : index
    %c0_33 = arith.constant 0 : index
    %11 = vector.load %arg7[%c0_29, %c0_30, %c1_31, %c0_32, %c0_33] : memref<1x10x2x10x8xf32, #tpu.memory_space<vmem>>, vector<1x8x1x10x8xf32>
    %12 = vector.shape_cast %11 : vector<1x8x1x10x8xf32> to vector<1x8x10x8xf32>
    %13 = vector.extract_strided_slice %12 {offsets = [0, 0, 0, 4], sizes = [1, 8, 8, 4], strides = [1, 1, 1, 1]} : vector<1x8x10x8xf32> to vector<1x8x8x4xf32>
    %14 = vector.shape_cast %13 : vector<1x8x8x4xf32> to vector<64x4xf32>
    %15 = vector.extract_strided_slice %12 {offsets = [0, 0, 1, 0], sizes = [1, 8, 8, 4], strides = [1, 1, 1, 1]} : vector<1x8x10x8xf32> to vector<1x8x8x4xf32>
    %16 = vector.shape_cast %15 : vector<1x8x8x4xf32> to vector<64x4xf32>
    %17 = vector.extract_strided_slice %12 {offsets = [0, 0, 1, 4], sizes = [1, 8, 8, 4], strides = [1, 1, 1, 1]} : vector<1x8x10x8xf32> to vector<1x8x8x4xf32>
    %18 = vector.shape_cast %17 : vector<1x8x8x4xf32> to vector<64x4xf32>
    %c0_34 = arith.constant 0 : index
    %c1_35 = arith.constant 1 : index
    %c0_36 = arith.constant 0 : index
    %c0_37 = arith.constant 0 : index
    %c0_38 = arith.constant 0 : index
    %19 = vector.load %arg7[%c0_34, %c1_35, %c0_36, %c0_37, %c0_38] : memref<1x10x2x10x8xf32, #tpu.memory_space<vmem>>, vector<1x8x1x10x8xf32>
    %20 = vector.shape_cast %19 : vector<1x8x1x10x8xf32> to vector<1x8x10x8xf32>
    %21 = vector.extract_strided_slice %20 {offsets = [0, 0, 0, 4], sizes = [1, 8, 8, 4], strides = [1, 1, 1, 1]} : vector<1x8x10x8xf32> to vector<1x8x8x4xf32>
    %22 = vector.shape_cast %21 : vector<1x8x8x4xf32> to vector<64x4xf32>
    %23 = vector.extract_strided_slice %20 {offsets = [0, 0, 1, 0], sizes = [1, 8, 8, 4], strides = [1, 1, 1, 1]} : vector<1x8x10x8xf32> to vector<1x8x8x4xf32>
    %24 = vector.shape_cast %23 : vector<1x8x8x4xf32> to vector<64x4xf32>
    %25 = vector.extract_strided_slice %20 {offsets = [0, 0, 1, 4], sizes = [1, 8, 8, 4], strides = [1, 1, 1, 1]} : vector<1x8x10x8xf32> to vector<1x8x8x4xf32>
    %26 = vector.shape_cast %25 : vector<1x8x8x4xf32> to vector<64x4xf32>
    %c0_39 = arith.constant 0 : index
    %c1_40 = arith.constant 1 : index
    %c1_41 = arith.constant 1 : index
    %c0_42 = arith.constant 0 : index
    %c0_43 = arith.constant 0 : index
    %27 = vector.load %arg7[%c0_39, %c1_40, %c1_41, %c0_42, %c0_43] : memref<1x10x2x10x8xf32, #tpu.memory_space<vmem>>, vector<1x8x1x10x8xf32>
    %28 = vector.shape_cast %27 : vector<1x8x1x10x8xf32> to vector<1x8x10x8xf32>
    %29 = vector.extract_strided_slice %28 {offsets = [0, 0, 0, 4], sizes = [1, 8, 8, 4], strides = [1, 1, 1, 1]} : vector<1x8x10x8xf32> to vector<1x8x8x4xf32>
    %30 = vector.shape_cast %29 : vector<1x8x8x4xf32> to vector<64x4xf32>
    %31 = vector.extract_strided_slice %28 {offsets = [0, 0, 1, 0], sizes = [1, 8, 8, 4], strides = [1, 1, 1, 1]} : vector<1x8x10x8xf32> to vector<1x8x8x4xf32>
    %32 = vector.shape_cast %31 : vector<1x8x8x4xf32> to vector<64x4xf32>
    %33 = vector.extract_strided_slice %28 {offsets = [0, 0, 1, 4], sizes = [1, 8, 8, 4], strides = [1, 1, 1, 1]} : vector<1x8x10x8xf32> to vector<1x8x8x4xf32>
    %34 = vector.shape_cast %33 : vector<1x8x8x4xf32> to vector<64x4xf32>
    %35 = tpu.concatenate %14, %16, %18, %22, %24, %26, %30, %32, %34 in 1 : vector<64x4xf32>, vector<64x4xf32>, vector<64x4xf32>, vector<64x4xf32>, vector<64x4xf32>, vector<64x4xf32>, vector<64x4xf32>, vector<64x4xf32>, vector<64x4xf32> -> vector<64x36xf32>
    %36 = arith.truncf %35 : vector<64x36xf32> to vector<64x36xbf16>
    %c0_44 = arith.constant 0 : index
    %c0_45 = arith.constant 0 : index
    %37 = vector.load %arg2[%c0_44, %c0_45] : memref<36x8xbf16, #tpu.memory_space<vmem>>, vector<36x8xbf16>
    %cst_46 = arith.constant dense<0.000000e+00> : vector<64x8xf32>
    %38 = tpu.matmul %36, %37, %cst_46 {dimension_numbers = #tpu.dot_dimension_numbers<[1], [0], [0], [1], [0, 0, 1, 1], [], []>} : vector<64x36xbf16>, vector<36x8xbf16>, vector<64x8xf32> -> vector<64x8xf32>
    %c0_47 = arith.constant 0 : index
    %c0_48 = arith.constant 0 : index
    %39 = vector.load %arg3[%c0_47, %c0_48] : memref<1x8xf32, #tpu.memory_space<vmem>>, vector<1x8xf32>
    %40 = vector.broadcast %39 : vector<1x8xf32> to vector<64x8xf32>
    %41 = arith.addf %38, %40 : vector<64x8xf32>
    %cst_49 = arith.constant 0.000000e+00 : f32
    %42 = vector.broadcast %cst_49 : f32 to vector<1x1x1x10x8xf32>
    %c0_50 = arith.constant 0 : index
    %c0_51 = arith.constant 0 : index
    %c0_52 = arith.constant 0 : index
    %c0_53 = arith.constant 0 : index
    %c0_54 = arith.constant 0 : index
    %43 = vector.load %arg8[%c0_50, %c0_51, %c0_52, %c0_53, %c0_54] : memref<1x10x1x10x8xf32, #tpu.memory_space<vmem>>, vector<1x1x1x10x8xf32>
    tpu.vector_store %arg8[%c0_50, %c0_51, %c0_52, %c0_53, %c0_54], %42 {strides = array<i32>} : memref<1x10x1x10x8xf32, #tpu.memory_space<vmem>>, vector<1x1x1x10x8xf32>,
    %cst_55 = arith.constant 0.000000e+00 : f32
    %44 = vector.broadcast %cst_55 : f32 to vector<1x1x1x10x8xf32>
    %c0_56 = arith.constant 0 : index
    %c9_57 = arith.constant 9 : index
    %c0_58 = arith.constant 0 : index
    %c0_59 = arith.constant 0 : index
    %c0_60 = arith.constant 0 : index
    %45 = vector.load %arg8[%c0_56, %c9_57, %c0_58, %c0_59, %c0_60] : memref<1x10x1x10x8xf32, #tpu.memory_space<vmem>>, vector<1x1x1x10x8xf32>
    tpu.vector_store %arg8[%c0_56, %c9_57, %c0_58, %c0_59, %c0_60], %44 {strides = array<i32>} : memref<1x10x1x10x8xf32, #tpu.memory_space<vmem>>, vector<1x1x1x10x8xf32>,
    %cst_61 = arith.constant 0.000000e+00 : f32
    %46 = vector.broadcast %cst_61 : f32 to vector<1x10x1x1x8xf32>
    %c0_62 = arith.constant 0 : index
    %c0_63 = arith.constant 0 : index
    %c0_64 = arith.constant 0 : index
    %c0_65 = arith.constant 0 : index
    %c0_66 = arith.constant 0 : index
    %47 = vector.load %arg8[%c0_62, %c0_63, %c0_64, %c0_65, %c0_66] : memref<1x10x1x10x8xf32, #tpu.memory_space<vmem>>, vector<1x10x1x1x8xf32>
    tpu.vector_store %arg8[%c0_62, %c0_63, %c0_64, %c0_65, %c0_66], %46 {strides = array<i32>} : memref<1x10x1x10x8xf32, #tpu.memory_space<vmem>>, vector<1x10x1x1x8xf32>,
    %cst_67 = arith.constant 0.000000e+00 : f32
    %48 = vector.broadcast %cst_67 : f32 to vector<1x10x1x1x8xf32>
    %c0_68 = arith.constant 0 : index
    %c0_69 = arith.constant 0 : index
    %c0_70 = arith.constant 0 : index
    %c9_71 = arith.constant 9 : index
    %c0_72 = arith.constant 0 : index
    %49 = vector.load %arg8[%c0_68, %c0_69, %c0_70, %c9_71, %c0_72] : memref<1x10x1x10x8xf32, #tpu.memory_space<vmem>>, vector<1x10x1x1x8xf32>
    tpu.vector_store %arg8[%c0_68, %c0_69, %c0_70, %c9_71, %c0_72], %48 {strides = array<i32>} : memref<1x10x1x10x8xf32, #tpu.memory_space<vmem>>, vector<1x10x1x1x8xf32>,
    %50 = vector.shape_cast %41 : vector<64x8xf32> to vector<1x8x1x8x8xf32>
    %c0_73 = arith.constant 0 : index
    %c1_74 = arith.constant 1 : index
    %c0_75 = arith.constant 0 : index
    %c1_76 = arith.constant 1 : index
    %c0_77 = arith.constant 0 : index
    %51 = vector.load %arg8[%c0_73, %c1_74, %c0_75, %c1_76, %c0_77] : memref<1x10x1x10x8xf32, #tpu.memory_space<vmem>>, vector<1x8x1x8x8xf32>
    tpu.vector_store %arg8[%c0_73, %c1_74, %c0_75, %c1_76, %c0_77], %50 {strides = array<i32>} : memref<1x10x1x10x8xf32, #tpu.memory_space<vmem>>, vector<1x8x1x8x8xf32>,
    %c0_78 = arith.constant 0 : index
    %c0_79 = arith.constant 0 : index
    %c0_80 = arith.constant 0 : index
    %c0_81 = arith.constant 0 : index
    %c0_82 = arith.constant 0 : index
    %52 = vector.load %arg8[%c0_78, %c0_79, %c0_80, %c0_81, %c0_82] : memref<1x10x1x10x8xf32, #tpu.memory_space<vmem>>, vector<1x8x1x10x8xf32>
    %53 = vector.shape_cast %52 : vector<1x8x1x10x8xf32> to vector<1x8x10x8xf32>
    %54 = vector.extract_strided_slice %53 {offsets = [0, 0, 0, 0], sizes = [1, 8, 8, 8], strides = [1, 1, 1, 1]} : vector<1x8x10x8xf32> to vector<1x8x8x8xf32>
    %55 = vector.shape_cast %54 : vector<1x8x8x8xf32> to vector<64x8xf32>
    %56 = vector.extract_strided_slice %53 {offsets = [0, 0, 1, 0], sizes = [1, 8, 8, 8], strides = [1, 1, 1, 1]} : vector<1x8x10x8xf32> to vector<1x8x8x8xf32>
    %57 = vector.shape_cast %56 : vector<1x8x8x8xf32> to vector<64x8xf32>
    %58 = vector.extract_strided_slice %53 {offsets = [0, 0, 2, 0], sizes = [1, 8, 8, 8], strides = [1, 1, 1, 1]} : vector<1x8x10x8xf32> to vector<1x8x8x8xf32>
    %59 = vector.shape_cast %58 : vector<1x8x8x8xf32> to vector<64x8xf32>
    %c0_83 = arith.constant 0 : index
    %c1_84 = arith.constant 1 : index
    %c0_85 = arith.constant 0 : index
    %c0_86 = arith.constant 0 : index
    %c0_87 = arith.constant 0 : index
    %60 = vector.load %arg8[%c0_83, %c1_84, %c0_85, %c0_86, %c0_87] : memref<1x10x1x10x8xf32, #tpu.memory_space<vmem>>, vector<1x8x1x10x8xf32>
    %61 = vector.shape_cast %60 : vector<1x8x1x10x8xf32> to vector<1x8x10x8xf32>
    %62 = vector.extract_strided_slice %61 {offsets = [0, 0, 0, 0], sizes = [1, 8, 8, 8], strides = [1, 1, 1, 1]} : vector<1x8x10x8xf32> to vector<1x8x8x8xf32>
    %63 = vector.shape_cast %62 : vector<1x8x8x8xf32> to vector<64x8xf32>
    %64 = vector.extract_strided_slice %61 {offsets = [0, 0, 1, 0], sizes = [1, 8, 8, 8], strides = [1, 1, 1, 1]} : vector<1x8x10x8xf32> to vector<1x8x8x8xf32>
    %65 = vector.shape_cast %64 : vector<1x8x8x8xf32> to vector<64x8xf32>
    %66 = vector.extract_strided_slice %61 {offsets = [0, 0, 2, 0], sizes = [1, 8, 8, 8], strides = [1, 1, 1, 1]} : vector<1x8x10x8xf32> to vector<1x8x8x8xf32>
    %67 = vector.shape_cast %66 : vector<1x8x8x8xf32> to vector<64x8xf32>
    %c0_88 = arith.constant 0 : index
    %c2 = arith.constant 2 : index
    %c0_89 = arith.constant 0 : index
    %c0_90 = arith.constant 0 : index
    %c0_91 = arith.constant 0 : index
    %68 = vector.load %arg8[%c0_88, %c2, %c0_89, %c0_90, %c0_91] : memref<1x10x1x10x8xf32, #tpu.memory_space<vmem>>, vector<1x8x1x10x8xf32>
    %69 = vector.shape_cast %68 : vector<1x8x1x10x8xf32> to vector<1x8x10x8xf32>
    %70 = vector.extract_strided_slice %69 {offsets = [0, 0, 0, 0], sizes = [1, 8, 8, 8], strides = [1, 1, 1, 1]} : vector<1x8x10x8xf32> to vector<1x8x8x8xf32>
    %71 = vector.shape_cast %70 : vector<1x8x8x8xf32> to vector<64x8xf32>
    %72 = vector.extract_strided_slice %69 {offsets = [0, 0, 1, 0], sizes = [1, 8, 8, 8], strides = [1, 1, 1, 1]} : vector<1x8x10x8xf32> to vector<1x8x8x8xf32>
    %73 = vector.shape_cast %72 : vector<1x8x8x8xf32> to vector<64x8xf32>
    %74 = vector.extract_strided_slice %69 {offsets = [0, 0, 2, 0], sizes = [1, 8, 8, 8], strides = [1, 1, 1, 1]} : vector<1x8x10x8xf32> to vector<1x8x8x8xf32>
    %75 = vector.shape_cast %74 : vector<1x8x8x8xf32> to vector<64x8xf32>
    %76 = tpu.concatenate %55, %57, %59, %63, %65, %67, %71, %73, %75 in 1 : vector<64x8xf32>, vector<64x8xf32>, vector<64x8xf32>, vector<64x8xf32>, vector<64x8xf32>, vector<64x8xf32>, vector<64x8xf32>, vector<64x8xf32>, vector<64x8xf32> -> vector<64x72xf32>
    %77 = arith.truncf %76 : vector<64x72xf32> to vector<64x72xbf16>
    %c0_92 = arith.constant 0 : index
    %c0_93 = arith.constant 0 : index
    %78 = vector.load %arg4[%c0_92, %c0_93] : memref<72x8xbf16, #tpu.memory_space<vmem>>, vector<72x8xbf16>
    %cst_94 = arith.constant dense<0.000000e+00> : vector<64x8xf32>
    %79 = tpu.matmul %77, %78, %cst_94 {dimension_numbers = #tpu.dot_dimension_numbers<[1], [0], [0], [1], [0, 0, 1, 1], [], []>} : vector<64x72xbf16>, vector<72x8xbf16>, vector<64x8xf32> -> vector<64x8xf32>
    %c0_95 = arith.constant 0 : index
    %c0_96 = arith.constant 0 : index
    %80 = vector.load %arg5[%c0_95, %c0_96] : memref<1x8xf32, #tpu.memory_space<vmem>>, vector<1x8xf32>
    %81 = vector.broadcast %80 : vector<1x8xf32> to vector<64x8xf32>
    %82 = arith.addf %79, %81 : vector<64x8xf32>
    %83 = tpu.transpose %82, [1, 0] : vector<64x8xf32> -> vector<8x64xf32>
    %c0_97 = arith.constant 0 : index
    %c0_98 = arith.constant 0 : index
    %c0_99 = arith.constant 0 : index
    %84 = vector.load %arg6[%c0_97, %c0_98, %c0_99] : memref<1x8x64xf32, #tpu.memory_space<vmem>>, vector<1x8x64xf32>
    %85 = vector.shape_cast %84 : vector<1x8x64xf32> to vector<8x64xf32>
    %86 = vector.shape_cast %83 : vector<8x64xf32> to vector<1x8x64xf32>
    tpu.vector_store %arg6[%c0_97, %c0_98, %c0_99], %86 {strides = array<i32>} : memref<1x8x64xf32, #tpu.memory_space<vmem>>, vector<1x8x64xf32>,
    return
  }
  func.func @transform_0(%arg0: i32) -> (i32, i32, i32, i32) {
    %c0_i32 = arith.constant 0 : i32
    %c0_i32_0 = arith.constant 0 : i32
    %c0_i32_1 = arith.constant 0 : i32
    %c0_i32_2 = arith.constant 0 : i32
    return %arg0, %c0_i32, %c0_i32_0, %c0_i32_1 : i32, i32, i32, i32
  }
  func.func @transform_1(%arg0: i32) -> (i32, i32) {
    %c0_i32 = arith.constant 0 : i32
    %c0_i32_0 = arith.constant 0 : i32
    %c0_i32_1 = arith.constant 0 : i32
    return %c0_i32, %c0_i32_0 : i32, i32
  }
  func.func @transform_2(%arg0: i32) -> (i32, i32) {
    %c0_i32 = arith.constant 0 : i32
    %c0_i32_0 = arith.constant 0 : i32
    %c0_i32_1 = arith.constant 0 : i32
    return %c0_i32, %c0_i32_0 : i32, i32
  }
  func.func @transform_3(%arg0: i32) -> (i32, i32) {
    %c0_i32 = arith.constant 0 : i32
    %c0_i32_0 = arith.constant 0 : i32
    %c0_i32_1 = arith.constant 0 : i32
    return %c0_i32, %c0_i32_0 : i32, i32
  }
  func.func @transform_4(%arg0: i32) -> (i32, i32) {
    %c0_i32 = arith.constant 0 : i32
    %c0_i32_0 = arith.constant 0 : i32
    %c0_i32_1 = arith.constant 0 : i32
    return %c0_i32, %c0_i32_0 : i32, i32
  }
  func.func @transform_5(%arg0: i32) -> (i32, i32, i32) {
    %c0_i32 = arith.constant 0 : i32
    %c0_i32_0 = arith.constant 0 : i32
    %c0_i32_1 = arith.constant 0 : i32
    return %arg0, %c0_i32, %c0_i32_0 : i32, i32, i32
  }
}

</mosaic_0001>

<llo_original>
// kernel: fused_conv_forward.1
$region0: #{fused_conv_forward.1}
  #allocation0 [shape = 'u32[]', space=smem, size = 0x4, offset = 0x4, fixed_abs, tag = 'smem constant byte address 0x4 - core index']
  #allocation1 [shape = 'u32[144,128]{1,0:T(1,128)}', space=vmem, size = 0x12000, scoped, tag = 'internal scratch']
  #allocation2 [shape = 'f32[1,10,2,10,8]{4,3,2,1,0:T(8,128)}', space=vmem, size = 0x28000, scoped, tag = 'scratch operand']
  #allocation3 [shape = 'f32[1,10,1,10,8]{4,3,2,1,0:T(8,128)}', space=vmem, size = 0x14000, scoped, tag = 'scratch operand']
  %s0 = inlined_call_operand.vmem [shape: f32[2,16,8,8], index: 0, kind: input, shape index: {}]
  %s1 = inlined_call_operand.vmem [shape: bf16[36,8], index: 1, kind: input, shape index: {}]
  %s2 = inlined_call_operand.vmem [shape: f32[1,8], index: 2, kind: input, shape index: {}]
  %s3 = inlined_call_operand.vmem [shape: bf16[72,8], index: 3, kind: input, shape index: {}]
  %s4 = inlined_call_operand.vmem [shape: f32[1,8], index: 4, kind: input, shape index: {}]
  %s5 = inlined_call_operand.vmem [shape: f32[2,8,64], index: 5, kind: output, shape index: {}]
  %s6 = sld [smem:[#allocation0]]
  $region53: #{fused_conv_forward.1} parent=0
    _
  %s8 = ssub.s32 1, %s6
  %s9 = scalar_select 0, %s8, %s6
  loop: start=0, step=1, limit=4
  $region2: #{fused_conv_forward.1} parent=0 // loop_pre_header
    _
  $region3: #{fused_conv_forward.1} parent=0 // loop_header
    %s11 = sphi 0, %s15
    %p12 = scmp.ge.s32.totalorder %s11, 4
    %s21 = sphi 0, %s23
    %s24 = sphi 0, %s21
    %s25 = sphi 0, %s24
    %s41 = sphi 0, %s25
    %s45 = sphi 0, %s45
    %s47 = sphi 0, %s45
    %s48 = sphi 0, %s47
    %s62 = sphi 0, %s48
    %s66 = sphi 0, %s66
    %s68 = sphi 0, %s66
    %s69 = sphi 0, %s68
    %s83 = sphi 0, %s69
    %s87 = sphi 0, %s87
    %s89 = sphi 0, %s87
    %s90 = sphi 0, %s89
    %s104 = sphi 0, %s90
    %s108 = sphi 0, %s108
    %s110 = sphi 0, %s108
    %s111 = sphi 0, %s110
    %s125 = sphi 0, %s111
    %s131 = sphi 0, %s133
    %s134 = sphi 0, %s131
    %s135 = sphi 0, %s134
    %s151 = sphi 0, %s135
  $region4: #{fused_conv_forward.1} parent=0 // loop_header_branch
    %14 = sbr.rel (%p12) target = $region8
  $region5: #{fused_conv_forward.1} parent=0 // loop_body
    %s16 = ssub.s32 %s11, 1
    %s17 = ssub.s32 %s11, 2
    %s18 = sadd.s32 %s11, 1
    %s19 = ssub.s32 %s11, %s18
    %p20 = scmp.eq.s32.totalorder %s19, 0
    %s22 = sadd.s32 %s21, 1
    %s23 = scalar_select %p20, %s21, %s22
    %p26 = pneg %p20
    %p27 = scmp.eq.s32.totalorder %s11, 1
    %p28 = por %p26, %p27
    %p29 = scmp.ne.s32.totalorder %s21, %s24
    %p30 = scmp.eq.s32.totalorder %s11, 0
    %p31 = por %p29, %p30
    %p32 = scmp.ne.s32.totalorder %s21, %s24
    %p33 = scmp.eq.s32.totalorder %s16, 1
    %p34 = por %p32, %p33
    %p35 = scmp.ne.s32.totalorder %s24, %s25
    %p36 = scmp.eq.s32.totalorder %s16, 0
    %p37 = por %p35, %p36
    %p38 = scmp.ne.s32.totalorder %s24, %s25
    %p39 = scmp.eq.s32.totalorder %s17, 1
    %p40 = por %p38, %p39
    %p42 = scmp.ne.s32.totalorder %s25, %s41
    %p43 = scmp.eq.s32.totalorder %s17, 0
    %p44 = por %p42, %p43
    %s46 = sadd.s32 %s45, 1
    %p49 = scmp.eq.s32.totalorder %s11, 1
    %p50 = scmp.ne.s32.totalorder %s45, %s47
    %p51 = scmp.eq.s32.totalorder %s11, 0
    %p52 = por %p50, %p51
    %p53 = scmp.ne.s32.totalorder %s45, %s47
    %p54 = scmp.eq.s32.totalorder %s16, 1
    %p55 = por %p53, %p54
    %p56 = scmp.ne.s32.totalorder %s47, %s48
    %p57 = scmp.eq.s32.totalorder %s16, 0
    %p58 = por %p56, %p57
    %p59 = scmp.ne.s32.totalorder %s47, %s48
    %p60 = scmp.eq.s32.totalorder %s17, 1
    %p61 = por %p59, %p60
    %p63 = scmp.ne.s32.totalorder %s48, %s62
    %p64 = scmp.eq.s32.totalorder %s17, 0
    %p65 = por %p63, %p64
    %s67 = sadd.s32 %s66, 1
    %p70 = scmp.eq.s32.totalorder %s11, 1
    %p71 = scmp.ne.s32.totalorder %s66, %s68
    %p72 = scmp.eq.s32.totalorder %s11, 0
    %p73 = por %p71, %p72
    %p74 = scmp.ne.s32.totalorder %s66, %s68
    %p75 = scmp.eq.s32.totalorder %s16, 1
    %p76 = por %p74, %p75
    %p77 = scmp.ne.s32.totalorder %s68, %s69
    %p78 = scmp.eq.s32.totalorder %s16, 0
    %p79 = por %p77, %p78
    %p80 = scmp.ne.s32.totalorder %s68, %s69
    %p81 = scmp.eq.s32.totalorder %s17, 1
    %p82 = por %p80, %p81
    %p84 = scmp.ne.s32.totalorder %s69, %s83
    %p85 = scmp.eq.s32.totalorder %s17, 0
    %p86 = por %p84, %p85
    %s88 = sadd.s32 %s87, 1
    %p91 = scmp.eq.s32.totalorder %s11, 1
    %p92 = scmp.ne.s32.totalorder %s87, %s89
    %p93 = scmp.eq.s32.totalorder %s11, 0
    %p94 = por %p92, %p93
    %p95 = scmp.ne.s32.totalorder %s87, %s89
    %p96 = scmp.eq.s32.totalorder %s16, 1
    %p97 = por %p95, %p96
    %p98 = scmp.ne.s32.totalorder %s89, %s90
    %p99 = scmp.eq.s32.totalorder %s16, 0
    %p100 = por %p98, %p99
    %p101 = scmp.ne.s32.totalorder %s89, %s90
    %p102 = scmp.eq.s32.totalorder %s17, 1
    %p103 = por %p101, %p102
    %p105 = scmp.ne.s32.totalorder %s90, %s104
    %p106 = scmp.eq.s32.totalorder %s17, 0
    %p107 = por %p105, %p106
    %s109 = sadd.s32 %s108, 1
    %p112 = scmp.eq.s32.totalorder %s11, 1
    %p113 = scmp.ne.s32.totalorder %s108, %s110
    %p114 = scmp.eq.s32.totalorder %s11, 0
    %p115 = por %p113, %p114
    %p116 = scmp.ne.s32.totalorder %s108, %s110
    %p117 = scmp.eq.s32.totalorder %s16, 1
    %p118 = por %p116, %p117
    %p119 = scmp.ne.s32.totalorder %s110, %s111
    %p120 = scmp.eq.s32.totalorder %s16, 0
    %p121 = por %p119, %p120
    %p122 = scmp.ne.s32.totalorder %s110, %s111
    %p123 = scmp.eq.s32.totalorder %s17, 1
    %p124 = por %p122, %p123
    %p126 = scmp.ne.s32.totalorder %s111, %s125
    %p127 = scmp.eq.s32.totalorder %s17, 0
    %p128 = por %p126, %p127
    %s129 = ssub.s32 %s11, %s18
    %p130 = scmp.eq.s32.totalorder %s129, 0
    %s132 = sadd.s32 %s131, 1
    %s133 = scalar_select %p130, %s131, %s132
    %p136 = pneg %p130
    %p137 = scmp.eq.s32.totalorder %s11, 1
    %p138 = por %p136, %p137
    %p139 = scmp.ne.s32.totalorder %s131, %s134
    %p140 = scmp.eq.s32.totalorder %s11, 0
    %p141 = por %p139, %p140
    %p142 = scmp.ne.s32.totalorder %s131, %s134
    %p143 = scmp.eq.s32.totalorder %s16, 1
    %p144 = por %p142, %p143
    %p145 = scmp.ne.s32.totalorder %s134, %s135
    %p146 = scmp.eq.s32.totalorder %s16, 0
    %p147 = por %p145, %p146
    %p148 = scmp.ne.s32.totalorder %s134, %s135
    %p149 = scmp.eq.s32.totalorder %s17, 1
    %p150 = por %p148, %p149
    %p152 = scmp.ne.s32.totalorder %s135, %s151
    %p153 = scmp.eq.s32.totalorder %s17, 0
    %p154 = por %p152, %p153
    %p155 = scmp.le.s32.totalorder 1, %s11
    %p156 = scmp.lt.s32.totalorder %s11, 3
    %p157 = pnand %p155, %p156
    %p158 = pneg %p157
    // Predicated region
    $region9: #{fused_conv_forward.1} parent=5 // pred_check
      _
    $region10: #{fused_conv_forward.1} parent=5 // pred_check_branch
      %160 = sbr.rel (%p157) target = $region12
    $region11: #{fused_conv_forward.1} parent=5 // pred_region
      %s161 = ssub.s32 %s11, 1
      // Predicated region
      $region13: #{fused_conv_forward.1} parent=11 // pred_check
        %p162 = pneg %p58
      $region14: #{fused_conv_forward.1} parent=11 // pred_check_branch
        %164 = sbr.rel (%p162) target = $region16
      $region15: #{fused_conv_forward.1} parent=11 // pred_region
        _
      $region16: #{fused_conv_forward.1} parent=11 // pred_fallthru
        _
      // Predicated region
      $region17: #{fused_conv_forward.1} parent=11 // pred_check
        %p165 = pneg %p79
      $region18: #{fused_conv_forward.1} parent=11 // pred_check_branch
        %167 = sbr.rel (%p165) target = $region20
      $region19: #{fused_conv_forward.1} parent=11 // pred_region
        _
      $region20: #{fused_conv_forward.1} parent=11 // pred_fallthru
        _
      // Predicated region
      $region21: #{fused_conv_forward.1} parent=11 // pred_check
        %p168 = pneg %p100
      $region22: #{fused_conv_forward.1} parent=11 // pred_check_branch
        %170 = sbr.rel (%p168) target = $region24
      $region23: #{fused_conv_forward.1} parent=11 // pred_region
        _
      $region24: #{fused_conv_forward.1} parent=11 // pred_fallthru
        _
      // Predicated region
      $region25: #{fused_conv_forward.1} parent=11 // pred_check
        %p171 = pneg %p121
      $region26: #{fused_conv_forward.1} parent=11 // pred_check_branch
        %173 = sbr.rel (%p171) target = $region28
      $region27: #{fused_conv_forward.1} parent=11 // pred_region
        _
      $region28: #{fused_conv_forward.1} parent=11 // pred_fallthru
        _
    $region12: #{fused_conv_forward.1} parent=5 // pred_fallthru
      _
    %p174 = scmp.lt.s32.totalorder %s11, 2
    // Predicated region
    $region29: #{fused_conv_forward.1} parent=5 // pred_check
      %p175 = pneg %p174
    $region30: #{fused_conv_forward.1} parent=5 // pred_check_branch
      %177 = sbr.rel (%p175) target = $region32
    $region31: #{fused_conv_forward.1} parent=5 // pred_region
      // Predicated region
      $region33: #{fused_conv_forward.1} parent=31 // pred_check
        %p178 = pneg %p31
      $region34: #{fused_conv_forward.1} parent=31 // pred_check_branch
        %180 = sbr.rel (%p178) target = $region36
      $region35: #{fused_conv_forward.1} parent=31 // pred_region
        %p181 = scmp.lt.s32.totalorder %s11, 1
        %s182 = scalar_select %p181, %s11, 1
        %s183 = smul.addr %s182, 16
        %s184 = smul.addr %s183, 8
        %s185 = scalar_lea.vmem %s0, %s184
      $region36: #{fused_conv_forward.1} parent=31 // pred_fallthru
        _
    $region32: #{fused_conv_forward.1} parent=5 // pred_fallthru
      _
    %p186 = scmp.le.s32.totalorder 1, %s11
    %p187 = scmp.lt.s32.totalorder %s11, 3
    %p188 = pnand %p186, %p187
    %p189 = pneg %p188
    // Predicated region
    $region37: #{fused_conv_forward.1} parent=5 // pred_check
      _
    $region38: #{fused_conv_forward.1} parent=5 // pred_check_branch
      %191 = sbr.rel (%p188) target = $region40
    $region39: #{fused_conv_forward.1} parent=5 // pred_region
      %s192 = ssub.s32 %s11, 1
      %p193 = scmp.lt.s32.totalorder %s16, 1
      %s194 = scalar_select %p193, %s16, 1
      %s195 = smul.addr %s194, 16
      %s196 = smul.addr %s195, 8
      %s197 = scalar_lea.vmem %s0, %s196
      %p198 = pneg %p37
      %p199 = pneg %p34
      %p200 = pneg %p58
      %p201 = pneg %p55
      %p202 = pneg %p79
      %p203 = pneg %p76
      %p204 = pneg %p100
      %p205 = pneg %p97
      %p206 = pneg %p121
      %p207 = pneg %p118
      %p208 = pneg %p147
      %p209 = pneg %p144
      %p210 = scmp.lt.s32.totalorder %s16, 1
      %s211 = scalar_select %p210, %s16, 1
      %s212 = smul.addr %s211, 8
      %s213 = scalar_lea.vmem %s5, %s212
      %p214 = scmp.lt.s32.totalorder %s16, 1
      %s215 = scalar_select %p214, %s16, 1
      %s216 = smul.addr %s215, 16
      %s217 = smul.addr %s216, 8
      %s218 = scalar_lea.vmem %s0, %s217
      %p219 = scmp.lt.s32.totalorder %s16, 1
      %s220 = scalar_select %p219, %s16, 1
      %s221 = smul.addr %s220, 8
      %s222 = scalar_lea.vmem %s5, %s221
      %vm224 = vcmask 64512
      %225 = vst.msk [vmem:[#allocation2] sm:$0xff] %vm224, 0.0
      %vm226 = vcmask 58368
      %227 = vst.msk [vmem:[#allocation2 + $0x8] sm:$0x3] %vm226, 0.0
      %228 = vst.msk [vmem:[#allocation2 + $0x10] sm:$0xff] %vm224, 0.0
      %229 = vst.msk [vmem:[#allocation2 + $0x18] sm:$0x3] %vm226, 0.0
      %s230 = scalar_lea.vmem [#allocation2], 288
      %231 = vst.msk [vmem:[%s230] sm:$0xff] %vm224, 0.0
      %232 = vst.msk [vmem:[%s230 + $0x8] sm:$0x3] %vm226, 0.0
      %233 = vst.msk [vmem:[%s230 + $0x10] sm:$0xff] %vm224, 0.0
      %234 = vst.msk [vmem:[%s230 + $0x18] sm:$0x3] %vm226, 0.0
      %vm235 = vcmask 57344
      %236 = vst.msk [vmem:[#allocation2] sm:$0x1] %vm235, 0.0
      %237 = vst.msk [vmem:[#allocation2 + $0x10] sm:$0x1] %vm235, 0.0
      %238 = vst.msk [vmem:[#allocation2 + $0x20] sm:$0x1] %vm235, 0.0
      %239 = vst.msk [vmem:[#allocation2 + $0x30] sm:$0x1] %vm235, 0.0
      %240 = vst.msk [vmem:[#allocation2 + $0x40] sm:$0x1] %vm235, 0.0
      %241 = vst.msk [vmem:[#allocation2 + $0x50] sm:$0x1] %vm235, 0.0
      %242 = vst.msk [vmem:[#allocation2 + $0x60] sm:$0x1] %vm235, 0.0
      %243 = vst.msk [vmem:[#allocation2 + $0x70] sm:$0x1] %vm235, 0.0
      %244 = vst.msk [vmem:[#allocation2 + $0x80] sm:$0x1] %vm235, 0.0
      %245 = vst.msk [vmem:[#allocation2 + $0x90] sm:$0x1] %vm235, 0.0
      %246 = vst.msk [vmem:[#allocation2 + $0xa0] sm:$0x1] %vm235, 0.0
      %247 = vst.msk [vmem:[#allocation2 + $0xb0] sm:$0x1] %vm235, 0.0
      %248 = vst.msk [vmem:[#allocation2 + $0xc0] sm:$0x1] %vm235, 0.0
      %249 = vst.msk [vmem:[#allocation2 + $0xd0] sm:$0x1] %vm235, 0.0
      %250 = vst.msk [vmem:[#allocation2 + $0xe0] sm:$0x1] %vm235, 0.0
      %251 = vst.msk [vmem:[#allocation2 + $0xf0] sm:$0x1] %vm235, 0.0
      %252 = vst.msk [vmem:[#allocation2 + $0x100] sm:$0x1] %vm235, 0.0
      %253 = vst.msk [vmem:[#allocation2 + $0x110] sm:$0x1] %vm235, 0.0
      %254 = vst.msk [vmem:[#allocation2 + $0x120] sm:$0x1] %vm235, 0.0
      %255 = vst.msk [vmem:[#allocation2 + $0x130] sm:$0x1] %vm235, 0.0
      %256 = vst.msk [vmem:[#allocation2 + $0x9] sm:$0x1] %vm235, 0.0
      %257 = vst.msk [vmem:[#allocation2 + $0x19] sm:$0x1] %vm235, 0.0
      %258 = vst.msk [vmem:[#allocation2 + $0x29] sm:$0x1] %vm235, 0.0
      %259 = vst.msk [vmem:[#allocation2 + $0x39] sm:$0x1] %vm235, 0.0
      %260 = vst.msk [vmem:[#allocation2 + $0x49] sm:$0x1] %vm235, 0.0
      %261 = vst.msk [vmem:[#allocation2 + $0x59] sm:$0x1] %vm235, 0.0
      %262 = vst.msk [vmem:[#allocation2 + $0x69] sm:$0x1] %vm235, 0.0
      %263 = vst.msk [vmem:[#allocation2 + $0x79] sm:$0x1] %vm235, 0.0
      %264 = vst.msk [vmem:[#allocation2 + $0x89] sm:$0x1] %vm235, 0.0
      %265 = vst.msk [vmem:[#allocation2 + $0x99] sm:$0x1] %vm235, 0.0
      %266 = vst.msk [vmem:[#allocation2 + $0xa9] sm:$0x1] %vm235, 0.0
      %267 = vst.msk [vmem:[#allocation2 + $0xb9] sm:$0x1] %vm235, 0.0
      %268 = vst.msk [vmem:[#allocation2 + $0xc9] sm:$0x1] %vm235, 0.0
      %269 = vst.msk [vmem:[#allocation2 + $0xd9] sm:$0x1] %vm235, 0.0
      %270 = vst.msk [vmem:[#allocation2 + $0xe9] sm:$0x1] %vm235, 0.0
      %271 = vst.msk [vmem:[#allocation2 + $0xf9] sm:$0x1] %vm235, 0.0
      %272 = vst.msk [vmem:[#allocation2 + $0x109] sm:$0x1] %vm235, 0.0
      %273 = vst.msk [vmem:[#allocation2 + $0x119] sm:$0x1] %vm235, 0.0
      %274 = vst.msk [vmem:[#allocation2 + $0x129] sm:$0x1] %vm235, 0.0
      %275 = vst.msk [vmem:[#allocation2 + $0x139] sm:$0x1] %vm235, 0.0
      %v276 = vld [vmem:[%s218] sm:$0xff]
      %v277 = vld [vmem:[%s218 + $0x8] sm:$0xff]
      %v278 = vld [vmem:[%s218 + $0x10] sm:$0xff]
      %v279 = vld [vmem:[%s218 + $0x18] sm:$0xff]
      %v280 = vld [vmem:[%s218 + $0x20] sm:$0xff]
      %v281 = vld [vmem:[%s218 + $0x28] sm:$0xff]
      %v282 = vld [vmem:[%s218 + $0x30] sm:$0xff]
      %v283 = vld [vmem:[%s218 + $0x38] sm:$0xff]
      %v284 = vld [vmem:[%s218 + $0x40] sm:$0xff]
      %v285 = vld [vmem:[%s218 + $0x48] sm:$0xff]
      %v286 = vld [vmem:[%s218 + $0x50] sm:$0xff]
      %v287 = vld [vmem:[%s218 + $0x58] sm:$0xff]
      %v288 = vld [vmem:[%s218 + $0x60] sm:$0xff]
      %v289 = vld [vmem:[%s218 + $0x68] sm:$0xff]
      %v290 = vld [vmem:[%s218 + $0x70] sm:$0xff]
      %v291 = vld [vmem:[%s218 + $0x78] sm:$0xff]
      %s292 = scalar_lea.vmem [#allocation2], 32
      %293 = vst.msk [vmem:[%s292 + $0x1] sm:$0xff] %vm224, %v276
      %294 = vst.msk [vmem:[%s292 + $0x11] sm:$0xff] %vm224, %v277
      %295 = vst.msk [vmem:[%s292 + $0x21] sm:$0xff] %vm224, %v278
      %296 = vst.msk [vmem:[%s292 + $0x31] sm:$0xff] %vm224, %v279
      %297 = vst.msk [vmem:[%s292 + $0x41] sm:$0xff] %vm224, %v280
      %298 = vst.msk [vmem:[%s292 + $0x51] sm:$0xff] %vm224, %v281
      %299 = vst.msk [vmem:[%s292 + $0x61] sm:$0xff] %vm224, %v282
      %300 = vst.msk [vmem:[%s292 + $0x71] sm:$0xff] %vm224, %v283
      %301 = vst.msk [vmem:[%s292 + $0x81] sm:$0xff] %vm224, %v284
      %302 = vst.msk [vmem:[%s292 + $0x91] sm:$0xff] %vm224, %v285
      %303 = vst.msk [vmem:[%s292 + $0xa1] sm:$0xff] %vm224, %v286
      %304 = vst.msk [vmem:[%s292 + $0xb1] sm:$0xff] %vm224, %v287
      %305 = vst.msk [vmem:[%s292 + $0xc1] sm:$0xff] %vm224, %v288
      %306 = vst.msk [vmem:[%s292 + $0xd1] sm:$0xff] %vm224, %v289
      %307 = vst.msk [vmem:[%s292 + $0xe1] sm:$0xff] %vm224, %v290
      %308 = vst.msk [vmem:[%s292 + $0xf1] sm:$0xff] %vm224, %v291
      %s309 = scalar_lea.vmem [#allocation2], 16
      %v310 = vld [vmem:[%s309] sm:$0xff]
      %v311 = vld [vmem:[%s309 + $0x8] sm:$0x3]
      %v312 = vld [vmem:[%s309 + $0x20] sm:$0xff]
      %v313 = vld [vmem:[%s309 + $0x28] sm:$0x3]
      %v314 = vld [vmem:[%s309 + $0x40] sm:$0xff]
      %v315 = vld [vmem:[%s309 + $0x48] sm:$0x3]
      %v316 = vld [vmem:[%s309 + $0x60] sm:$0xff]
      %v317 = vld [vmem:[%s309 + $0x68] sm:$0x3]
      %v318 = vld [vmem:[%s309 + $0x80] sm:$0xff]
      %v319 = vld [vmem:[%s309 + $0x88] sm:$0x3]
      %v320 = vld [vmem:[%s309 + $0xa0] sm:$0xff]
      %v321 = vld [vmem:[%s309 + $0xa8] sm:$0x3]
      %v322 = vld [vmem:[%s309 + $0xc0] sm:$0xff]
      %v323 = vld [vmem:[%s309 + $0xc8] sm:$0x3]
      %v324 = vld [vmem:[%s309 + $0xe0] sm:$0xff]
      %v325 = vld [vmem:[%s309 + $0xe8] sm:$0x3]
      %vm342 = vcmask 1046528
      %v343 = vrot.slane %v310, 1
      %v344 = vrot.slane %v311, 1
      %v345 = vsel %vm342, %v343, %v344
      %v346 = vrot.slane %v312, 1
      %v347 = vrot.slane %v313, 1
      %v348 = vsel %vm342, %v346, %v347
      %v349 = vrot.slane %v314, 1
      %v350 = vrot.slane %v315, 1
      %v351 = vsel %vm342, %v349, %v350
      %v352 = vrot.slane %v316, 1
      %v353 = vrot.slane %v317, 1
      %v354 = vsel %vm342, %v352, %v353
      %v355 = vrot.slane %v318, 1
      %v356 = vrot.slane %v319, 1
      %v357 = vsel %vm342, %v355, %v356
      %v358 = vrot.slane %v320, 1
      %v359 = vrot.slane %v321, 1
      %v360 = vsel %vm342, %v358, %v359
      %v361 = vrot.slane %v322, 1
      %v362 = vrot.slane %v323, 1
      %v363 = vsel %vm342, %v361, %v362
      %v364 = vrot.slane %v324, 1
      %v365 = vrot.slane %v325, 1
      %v366 = vsel %vm342, %v364, %v365
      %v367 = vld [vmem:[%s292] sm:$0xff]
      %v368 = vld [vmem:[%s292 + $0x8] sm:$0x3]
      %v369 = vld [vmem:[%s292 + $0x20] sm:$0xff]
      %v370 = vld [vmem:[%s292 + $0x28] sm:$0x3]
      %v371 = vld [vmem:[%s292 + $0x40] sm:$0xff]
      %v372 = vld [vmem:[%s292 + $0x48] sm:$0x3]
      %v373 = vld [vmem:[%s292 + $0x60] sm:$0xff]
      %v374 = vld [vmem:[%s292 + $0x68] sm:$0x3]
      %v375 = vld [vmem:[%s292 + $0x80] sm:$0xff]
      %v376 = vld [vmem:[%s292 + $0x88] sm:$0x3]
      %v377 = vld [vmem:[%s292 + $0xa0] sm:$0xff]
      %v378 = vld [vmem:[%s292 + $0xa8] sm:$0x3]
      %v379 = vld [vmem:[%s292 + $0xc0] sm:$0xff]
      %v380 = vld [vmem:[%s292 + $0xc8] sm:$0x3]
      %v381 = vld [vmem:[%s292 + $0xe0] sm:$0xff]
      %v382 = vld [vmem:[%s292 + $0xe8] sm:$0x3]
      %v399 = vrot.slane %v367, 1
      %v400 = vrot.slane %v368, 1
      %v401 = vsel %vm342, %v399, %v400
      %v402 = vrot.slane %v369, 1
      %v403 = vrot.slane %v370, 1
      %v404 = vsel %vm342, %v402, %v403
      %v405 = vrot.slane %v371, 1
      %v406 = vrot.slane %v372, 1
      %v407 = vsel %vm342, %v405, %v406
      %v408 = vrot.slane %v373, 1
      %v409 = vrot.slane %v374, 1
      %v410 = vsel %vm342, %v408, %v409
      %v411 = vrot.slane %v375, 1
      %v412 = vrot.slane %v376, 1
      %v413 = vsel %vm342, %v411, %v412
      %v414 = vrot.slane %v377, 1
      %v415 = vrot.slane %v378, 1
      %v416 = vsel %vm342, %v414, %v415
      %v417 = vrot.slane %v379, 1
      %v418 = vrot.slane %v380, 1
      %v419 = vsel %vm342, %v417, %v418
      %v420 = vrot.slane %v381, 1
      %v421 = vrot.slane %v382, 1
      %v422 = vsel %vm342, %v420, %v421
      %s423 = scalar_lea.vmem [#allocation2], 48
      %v424 = vld [vmem:[%s423] sm:$0xff]
      %v425 = vld [vmem:[%s423 + $0x8] sm:$0x3]
      %v426 = vld [vmem:[%s423 + $0x20] sm:$0xff]
      %v427 = vld [vmem:[%s423 + $0x28] sm:$0x3]
      %v428 = vld [vmem:[%s423 + $0x40] sm:$0xff]
      %v429 = vld [vmem:[%s423 + $0x48] sm:$0x3]
      %v430 = vld [vmem:[%s423 + $0x60] sm:$0xff]
      %v431 = vld [vmem:[%s423 + $0x68] sm:$0x3]
      %v432 = vld [vmem:[%s423 + $0x80] sm:$0xff]
      %v433 = vld [vmem:[%s423 + $0x88] sm:$0x3]
      %v434 = vld [vmem:[%s423 + $0xa0] sm:$0xff]
      %v435 = vld [vmem:[%s423 + $0xa8] sm:$0x3]
      %v436 = vld [vmem:[%s423 + $0xc0] sm:$0xff]
      %v437 = vld [vmem:[%s423 + $0xc8] sm:$0x3]
      %v438 = vld [vmem:[%s423 + $0xe0] sm:$0xff]
      %v439 = vld [vmem:[%s423 + $0xe8] sm:$0x3]
      %v456 = vrot.slane %v424, 1
      %v457 = vrot.slane %v425, 1
      %v458 = vsel %vm342, %v456, %v457
      %v459 = vrot.slane %v426, 1
      %v460 = vrot.slane %v427, 1
      %v461 = vsel %vm342, %v459, %v460
      %v462 = vrot.slane %v428, 1
      %v463 = vrot.slane %v429, 1
      %v464 = vsel %vm342, %v462, %v463
      %v465 = vrot.slane %v430, 1
      %v466 = vrot.slane %v431, 1
      %v467 = vsel %vm342, %v465, %v466
      %v468 = vrot.slane %v432, 1
      %v469 = vrot.slane %v433, 1
      %v470 = vsel %vm342, %v468, %v469
      %v471 = vrot.slane %v434, 1
      %v472 = vrot.slane %v435, 1
      %v473 = vsel %vm342, %v471, %v472
      %v474 = vrot.slane %v436, 1
      %v475 = vrot.slane %v437, 1
      %v476 = vsel %vm342, %v474, %v475
      %v477 = vrot.slane %v438, 1
      %v478 = vrot.slane %v439, 1
      %v479 = vsel %vm342, %v477, %v478
      %480 = vrot.lane.b32.xlu0 %v310, 124
      %v481 = vpop.permute.xlu0 %480
      %482 = vrot.lane.b32.xlu0 %v312, 124
      %v483 = vpop.permute.xlu0 %482
      %484 = vrot.lane.b32.xlu0 %v314, 124
      %v485 = vpop.permute.xlu0 %484
      %486 = vrot.lane.b32.xlu0 %v316, 124
      %v487 = vpop.permute.xlu0 %486
      %488 = vrot.lane.b32.xlu0 %v318, 124
      %v489 = vpop.permute.xlu0 %488
      %490 = vrot.lane.b32.xlu0 %v320, 124
      %v491 = vpop.permute.xlu0 %490
      %492 = vrot.lane.b32.xlu0 %v322, 124
      %v493 = vpop.permute.xlu0 %492
      %494 = vrot.lane.b32.xlu0 %v324, 124
      %v495 = vpop.permute.xlu0 %494
      %504 = vrot.lane.b32.xlu0 %v345, 4
      %v505 = vpop.permute.xlu0 %504
      %506 = vrot.lane.b32.xlu0 %v348, 4
      %v507 = vpop.permute.xlu0 %506
      %508 = vrot.lane.b32.xlu0 %v351, 4
      %v509 = vpop.permute.xlu0 %508
      %510 = vrot.lane.b32.xlu0 %v354, 4
      %v511 = vpop.permute.xlu0 %510
      %512 = vrot.lane.b32.xlu0 %v357, 4
      %v513 = vpop.permute.xlu0 %512
      %514 = vrot.lane.b32.xlu0 %v360, 4
      %v515 = vpop.permute.xlu0 %514
      %516 = vrot.lane.b32.xlu0 %v363, 4
      %v517 = vpop.permute.xlu0 %516
      %518 = vrot.lane.b32.xlu0 %v366, 4
      %v519 = vpop.permute.xlu0 %518
      %528 = vrot.lane.b32.xlu0 %v367, 8
      %v529 = vpop.permute.xlu0 %528
      %530 = vrot.lane.b32.xlu0 %v369, 8
      %v531 = vpop.permute.xlu0 %530
      %532 = vrot.lane.b32.xlu0 %v371, 8
      %v533 = vpop.permute.xlu0 %532
      %534 = vrot.lane.b32.xlu0 %v373, 8
      %v535 = vpop.permute.xlu0 %534
      %536 = vrot.lane.b32.xlu0 %v375, 8
      %v537 = vpop.permute.xlu0 %536
      %538 = vrot.lane.b32.xlu0 %v377, 8
      %v539 = vpop.permute.xlu0 %538
      %540 = vrot.lane.b32.xlu0 %v379, 8
      %v541 = vpop.permute.xlu0 %540
      %542 = vrot.lane.b32.xlu0 %v381, 8
      %v543 = vpop.permute.xlu0 %542
      %552 = vrot.lane.b32.xlu0 %v401, 16
      %v553 = vpop.permute.xlu0 %552
      %554 = vrot.lane.b32.xlu0 %v404, 16
      %v555 = vpop.permute.xlu0 %554
      %556 = vrot.lane.b32.xlu0 %v407, 16
      %v557 = vpop.permute.xlu0 %556
      %558 = vrot.lane.b32.xlu0 %v410, 16
      %v559 = vpop.permute.xlu0 %558
      %560 = vrot.lane.b32.xlu0 %v413, 16
      %v561 = vpop.permute.xlu0 %560
      %562 = vrot.lane.b32.xlu0 %v416, 16
      %v563 = vpop.permute.xlu0 %562
      %564 = vrot.lane.b32.xlu0 %v419, 16
      %v565 = vpop.permute.xlu0 %564
      %566 = vrot.lane.b32.xlu0 %v422, 16
      %v567 = vpop.permute.xlu0 %566
      %576 = vrot.lane.b32.xlu0 %v424, 20
      %v577 = vpop.permute.xlu0 %576
      %578 = vrot.lane.b32.xlu0 %v426, 20
      %v579 = vpop.permute.xlu0 %578
      %580 = vrot.lane.b32.xlu0 %v428, 20
      %v581 = vpop.permute.xlu0 %580
      %582 = vrot.lane.b32.xlu0 %v430, 20
      %v583 = vpop.permute.xlu0 %582
      %584 = vrot.lane.b32.xlu0 %v432, 20
      %v585 = vpop.permute.xlu0 %584
      %586 = vrot.lane.b32.xlu0 %v434, 20
      %v587 = vpop.permute.xlu0 %586
      %588 = vrot.lane.b32.xlu0 %v436, 20
      %v589 = vpop.permute.xlu0 %588
      %590 = vrot.lane.b32.xlu0 %v438, 20
      %v591 = vpop.permute.xlu0 %590
      %600 = vrot.lane.b32.xlu0 %v458, 28
      %v601 = vpop.permute.xlu0 %600
      %602 = vrot.lane.b32.xlu0 %v461, 28
      %v603 = vpop.permute.xlu0 %602
      %604 = vrot.lane.b32.xlu0 %v464, 28
      %v605 = vpop.permute.xlu0 %604
      %606 = vrot.lane.b32.xlu0 %v467, 28
      %v607 = vpop.permute.xlu0 %606
      %608 = vrot.lane.b32.xlu0 %v470, 28
      %v609 = vpop.permute.xlu0 %608
      %610 = vrot.lane.b32.xlu0 %v473, 28
      %v611 = vpop.permute.xlu0 %610
      %612 = vrot.lane.b32.xlu0 %v476, 28
      %v613 = vpop.permute.xlu0 %612
      %614 = vrot.lane.b32.xlu0 %v479, 28
      %v615 = vpop.permute.xlu0 %614
      %vm624 = vcmask 31744
      %v625 = vsel %vm624, %v481, %v505
      %v626 = vsel %vm624, %v483, %v507
      %v627 = vsel %vm624, %v485, %v509
      %v628 = vsel %vm624, %v487, %v511
      %v629 = vsel %vm624, %v489, %v513
      %v630 = vsel %vm624, %v491, %v515
      %v631 = vsel %vm624, %v493, %v517
      %v632 = vsel %vm624, %v495, %v519
      %v633 = vsel %vm224, %v625, %v505
      %v634 = vsel %vm224, %v626, %v507
      %v635 = vsel %vm224, %v627, %v509
      %v636 = vsel %vm224, %v628, %v511
      %v637 = vsel %vm224, %v629, %v513
      %v638 = vsel %vm224, %v630, %v515
      %v639 = vsel %vm224, %v631, %v517
      %v640 = vsel %vm224, %v632, %v519
      %vm641 = vcmask 97280
      %v642 = vsel %vm641, %v633, %v529
      %v643 = vsel %vm641, %v634, %v531
      %v644 = vsel %vm641, %v635, %v533
      %v645 = vsel %vm641, %v636, %v535
      %v646 = vsel %vm641, %v637, %v537
      %v647 = vsel %vm641, %v638, %v539
      %v648 = vsel %vm641, %v639, %v541
      %v649 = vsel %vm641, %v640, %v543
      %vm650 = vcmask 130048
      %v651 = vsel %vm650, %v642, %v553
      %v652 = vsel %vm650, %v643, %v555
      %v653 = vsel %vm650, %v644, %v557
      %v654 = vsel %vm650, %v645, %v559
      %v655 = vsel %vm650, %v646, %v561
      %v656 = vsel %vm650, %v647, %v563
      %v657 = vsel %vm650, %v648, %v565
      %v658 = vsel %vm650, %v649, %v567
      %vm659 = vcmask 162816
      %v660 = vsel %vm659, %v651, %v553
      %v661 = vsel %vm659, %v652, %v555
      %v662 = vsel %vm659, %v653, %v557
      %v663 = vsel %vm659, %v654, %v559
      %v664 = vsel %vm659, %v655, %v561
      %v665 = vsel %vm659, %v656, %v563
      %v666 = vsel %vm659, %v657, %v565
      %v667 = vsel %vm659, %v658, %v567
      %vm668 = vcmask 195584
      %v669 = vsel %vm668, %v660, %v577
      %v670 = vsel %vm668, %v661, %v579
      %v671 = vsel %vm668, %v662, %v581
      %v672 = vsel %vm668, %v663, %v583
      %v673 = vsel %vm668, %v664, %v585
      %v674 = vsel %vm668, %v665, %v587
      %v675 = vsel %vm668, %v666, %v589
      %v676 = vsel %vm668, %v667, %v591
      %vm677 = vcmask 228352
      %v678 = vsel %vm677, %v669, %v601
      %v679 = vsel %vm677, %v670, %v603
      %v680 = vsel %vm677, %v671, %v605
      %v681 = vsel %vm677, %v672, %v607
      %v682 = vsel %vm677, %v673, %v609
      %v683 = vsel %vm677, %v674, %v611
      %v684 = vsel %vm677, %v675, %v613
      %v685 = vsel %vm677, %v676, %v615
      %vm686 = vcmask 261120
      %v687 = vsel %vm686, %v678, %v601
      %v688 = vsel %vm686, %v679, %v603
      %v689 = vsel %vm686, %v680, %v605
      %v690 = vsel %vm686, %v681, %v607
      %v691 = vsel %vm686, %v682, %v609
      %v692 = vsel %vm686, %v683, %v611
      %v693 = vsel %vm686, %v684, %v613
      %v694 = vsel %vm686, %v685, %v615
      %v695 = vpack.c.bf16 %v688, %v687
      %v696 = vpack.c.bf16 %v690, %v689
      %v697 = vpack.c.bf16 %v692, %v691
      %v698 = vpack.c.bf16 %v694, %v693
      %v699 = vld [vmem:[%s1] sm:$0xf]
      %v700 = vld [vmem:[%s1 + $0x4] sm:$0xf]
      %v701 = vld [vmem:[%s1 + $0x8] sm:$0xf]
      %v702 = vld [vmem:[%s1 + $0xc] sm:$0xf]
      %v703 = vld [vmem:[%s1 + $0x10] sm:$0x3]
      %v704 = vld [vmem:[%s2] sm:$0x1]
      %v706 = vlaneseq
      %v707 = vshrl.u32 %v706, 7
      %v708 = vsub.s32 0, %v707
      %v709 = vrot.slane %v704, %v708
      %v716 = vunpack.c.l.b16 %v699
      %v717 = vunpack.c.l.b16 %v700
      %v718 = vunpack.c.l.b16 %v701
      %v719 = vunpack.c.l.b16 %v702
      %v720 = vunpack.c.l.b16 %v703
      %v721 = vpack.c.b16 %v717, %v716
      %v722 = vpack.c.b16 %v719, %v718
      %v723 = vpack.c.b16 %v720, %v720
      %vm726 = vcmask 293888
      %v728 = vsel %vm726, %v695, 0
      %v731 = vsel %vm726, %v696, 0
      %v734 = vsel %vm726, %v697, 0
      %v737 = vsel %vm726, %v698, 0
      %vm739 = vcmask 1041408
      %v741 = vsel %vm739, %v723, 0
      %743 = vmatprep.subr.bf16.mxu0 0
      %744 = vmatpush1.bf16.msra.mxu0 %v721
      %745 = vmatprep.subr.bf16.mxu0 0
      %746 = vmatpush1.bf16.msra.mxu0 %v722
      %747 = vmatprep.subr.bf16.mxu0 0
      %748 = vmatpush1.bf16.msra.mxu0 %v741
      %749 = vmatprep.subr.bf16.mxu0 0
      %750 = vmatpush1.bf16.msra.mxu0 0
      %751 = vmatprep.subr.bf16.mxu0 0
      %752 = vmatpush1.bf16.msra.mxu0 0
      %753 = vmatprep.subr.bf16.mxu0 0
      %754 = vmatpush1.bf16.msra.mxu0 0
      %755 = vmatprep.subr.bf16.mxu0 0
      %756 = vmatpush1.bf16.msra.mxu0 0
      %757 = vmatprep.subr.bf16.mxu0 0
      %758 = vmatpush1.bf16.msra.mxu0 0
      %759 = vmatprep.subr.bf16.mxu0 0
      %760 = vmatpush1.bf16.msra.mxu0 0
      %761 = vmatprep.subr.bf16.mxu0 0
      %762 = vmatpush1.bf16.msra.mxu0 0
      %763 = vmatprep.subr.bf16.mxu0 0
      %764 = vmatpush1.bf16.msra.mxu0 0
      %765 = vmatprep.subr.bf16.mxu0 0
      %766 = vmatpush1.bf16.msra.mxu0 0
      %767 = vmatprep.subr.bf16.mxu0 0
      %768 = vmatpush1.bf16.msra.mxu0 0
      %769 = vmatprep.subr.bf16.mxu0 0
      %770 = vmatpush1.bf16.msra.mxu0 0
      %771 = vmatprep.subr.bf16.mxu0 0
      %772 = vmatpush1.bf16.msra.mxu0 0
      %773 = vmatprep.subr.bf16.mxu0 0
      %774 = vmatpush1.bf16.msra.mxu0 0
      %775 = vmatprep.mubr.bf16.mxu0 0
      %776 = vmatmul.mubr.bf16.gmra.mrb[0].mxu0 %v728
      %v777 = vpop.f32.mrb[0].mxu0
      %v778 = vadd.f32 %v709, %v777
      %v779 = vpop.f32.mrb[0].mxu0
      %v780 = vpop.f32.mrb[0].mxu0
      %v781 = vadd.f32 %v709, %v780
      %v782 = vpop.f32.mrb[0].mxu0
      %783 = vmatprep.mubr.bf16.mxu0 0
      %784 = vmatmul.mubr.bf16.gmra.mrb[0].mxu0 %v731
      %v785 = vpop.f32.mrb[0].mxu0
      %v786 = vadd.f32 %v709, %v785
      %v787 = vpop.f32.mrb[0].mxu0
      %v788 = vpop.f32.mrb[0].mxu0
      %v789 = vadd.f32 %v709, %v788
      %v790 = vpop.f32.mrb[0].mxu0
      %791 = vmatprep.mubr.bf16.mxu0 0
      %792 = vmatmul.mubr.bf16.gmra.mrb[0].mxu0 %v734
      %v793 = vpop.f32.mrb[0].mxu0
      %v794 = vadd.f32 %v709, %v793
      %v795 = vpop.f32.mrb[0].mxu0
      %v796 = vpop.f32.mrb[0].mxu0
      %v797 = vadd.f32 %v709, %v796
      %v798 = vpop.f32.mrb[0].mxu0
      %799 = vmatprep.mubr.bf16.mxu0 0
      %800 = vmatmul.mubr.bf16.gmra.mrb[0].mxu0 %v737
      %v801 = vpop.f32.mrb[0].mxu0
      %v802 = vadd.f32 %v709, %v801
      %v803 = vpop.f32.mrb[0].mxu0
      %v804 = vpop.f32.mrb[0].mxu0
      %v805 = vadd.f32 %v709, %v804
      %v806 = vpop.f32.mrb[0].mxu0
      %807 = vdwg.mxu0
      %808 = vst.msk [vmem:[#allocation3] sm:$0xff] %vm224, 0.0
      %809 = vst.msk [vmem:[#allocation3 + $0x8] sm:$0x3] %vm226, 0.0
      %s810 = scalar_lea.vmem [#allocation3], 144
      %811 = vst.msk [vmem:[%s810] sm:$0xff] %vm224, 0.0
      %812 = vst.msk [vmem:[%s810 + $0x8] sm:$0x3] %vm226, 0.0
      %813 = vst.msk [vmem:[#allocation3] sm:$0x1] %vm235, 0.0
      %814 = vst.msk [vmem:[#allocation3 + $0x10] sm:$0x1] %vm235, 0.0
      %815 = vst.msk [vmem:[#allocation3 + $0x20] sm:$0x1] %vm235, 0.0
      %816 = vst.msk [vmem:[#allocation3 + $0x30] sm:$0x1] %vm235, 0.0
      %817 = vst.msk [vmem:[#allocation3 + $0x40] sm:$0x1] %vm235, 0.0
      %818 = vst.msk [vmem:[#allocation3 + $0x50] sm:$0x1] %vm235, 0.0
      %819 = vst.msk [vmem:[#allocation3 + $0x60] sm:$0x1] %vm235, 0.0
      %820 = vst.msk [vmem:[#allocation3 + $0x70] sm:$0x1] %vm235, 0.0
      %821 = vst.msk [vmem:[#allocation3 + $0x80] sm:$0x1] %vm235, 0.0
      %822 = vst.msk [vmem:[#allocation3 + $0x90] sm:$0x1] %vm235, 0.0
      %823 = vst.msk [vmem:[#allocation3 + $0x9] sm:$0x1] %vm235, 0.0
      %824 = vst.msk [vmem:[#allocation3 + $0x19] sm:$0x1] %vm235, 0.0
      %825 = vst.msk [vmem:[#allocation3 + $0x29] sm:$0x1] %vm235, 0.0
      %826 = vst.msk [vmem:[#allocation3 + $0x39] sm:$0x1] %vm235, 0.0
      %827 = vst.msk [vmem:[#allocation3 + $0x49] sm:$0x1] %vm235, 0.0
      %828 = vst.msk [vmem:[#allocation3 + $0x59] sm:$0x1] %vm235, 0.0
      %829 = vst.msk [vmem:[#allocation3 + $0x69] sm:$0x1] %vm235, 0.0
      %830 = vst.msk [vmem:[#allocation3 + $0x79] sm:$0x1] %vm235, 0.0
      %831 = vst.msk [vmem:[#allocation3 + $0x89] sm:$0x1] %vm235, 0.0
      %832 = vst.msk [vmem:[#allocation3 + $0x99] sm:$0x1] %vm235, 0.0
      %s833 = scalar_lea.vmem [#allocation3], 16
      %834 = vst.msk [vmem:[%s833 + $0x1] sm:$0xff] %vm224, %v778
      %835 = vst.msk [vmem:[%s833 + $0x11] sm:$0xff] %vm224, %v781
      %836 = vst.msk [vmem:[%s833 + $0x21] sm:$0xff] %vm224, %v786
      %837 = vst.msk [vmem:[%s833 + $0x31] sm:$0xff] %vm224, %v789
      %838 = vst.msk [vmem:[%s833 + $0x41] sm:$0xff] %vm224, %v794
      %839 = vst.msk [vmem:[%s833 + $0x51] sm:$0xff] %vm224, %v797
      %840 = vst.msk [vmem:[%s833 + $0x61] sm:$0xff] %vm224, %v802
      %841 = vst.msk [vmem:[%s833 + $0x71] sm:$0xff] %vm224, %v805
      %v842 = vld [vmem:[#allocation3] sm:$0xff]
      %v843 = vld [vmem:[#allocation3 + $0x8] sm:$0x3]
      %v844 = vld [vmem:[#allocation3 + $0x10] sm:$0xff]
      %v845 = vld [vmem:[#allocation3 + $0x18] sm:$0x3]
      %v846 = vld [vmem:[#allocation3 + $0x20] sm:$0xff]
      %v847 = vld [vmem:[#allocation3 + $0x28] sm:$0x3]
      %v848 = vld [vmem:[#allocation3 + $0x30] sm:$0xff]
      %v849 = vld [vmem:[#allocation3 + $0x38] sm:$0x3]
      %v850 = vld [vmem:[#allocation3 + $0x40] sm:$0xff]
      %v851 = vld [vmem:[#allocation3 + $0x48] sm:$0x3]
      %v852 = vld [vmem:[#allocation3 + $0x50] sm:$0xff]
      %v853 = vld [vmem:[#allocation3 + $0x58] sm:$0x3]
      %v854 = vld [vmem:[#allocation3 + $0x60] sm:$0xff]
      %v855 = vld [vmem:[#allocation3 + $0x68] sm:$0x3]
      %v856 = vld [vmem:[#allocation3 + $0x70] sm:$0xff]
      %v857 = vld [vmem:[#allocation3 + $0x78] sm:$0x3]
      %v874 = vrot.slane %v842, 1
      %v875 = vrot.slane %v843, 1
      %v876 = vsel %vm342, %v874, %v875
      %v877 = vrot.slane %v844, 1
      %v878 = vrot.slane %v845, 1
      %v879 = vsel %vm342, %v877, %v878
      %v880 = vrot.slane %v846, 1
      %v881 = vrot.slane %v847, 1
      %v882 = vsel %vm342, %v880, %v881
      %v883 = vrot.slane %v848, 1
      %v884 = vrot.slane %v849, 1
      %v885 = vsel %vm342, %v883, %v884
      %v886 = vrot.slane %v850, 1
      %v887 = vrot.slane %v851, 1
      %v888 = vsel %vm342, %v886, %v887
      %v889 = vrot.slane %v852, 1
      %v890 = vrot.slane %v853, 1
      %v891 = vsel %vm342, %v889, %v890
      %v892 = vrot.slane %v854, 1
      %v893 = vrot.slane %v855, 1
      %v894 = vsel %vm342, %v892, %v893
      %v895 = vrot.slane %v856, 1
      %v896 = vrot.slane %v857, 1
      %v897 = vsel %vm342, %v895, %v896
      %vm898 = vcmask 1045504
      %v899 = vrot.slane %v842, 2
      %v900 = vrot.slane %v843, 2
      %v901 = vsel %vm898, %v899, %v900
      %v902 = vrot.slane %v844, 2
      %v903 = vrot.slane %v845, 2
      %v904 = vsel %vm898, %v902, %v903
      %v905 = vrot.slane %v846, 2
      %v906 = vrot.slane %v847, 2
      %v907 = vsel %vm898, %v905, %v906
      %v908 = vrot.slane %v848, 2
      %v909 = vrot.slane %v849, 2
      %v910 = vsel %vm898, %v908, %v909
      %v911 = vrot.slane %v850, 2
      %v912 = vrot.slane %v851, 2
      %v913 = vsel %vm898, %v911, %v912
      %v914 = vrot.slane %v852, 2
      %v915 = vrot.slane %v853, 2
      %v916 = vsel %vm898, %v914, %v915
      %v917 = vrot.slane %v854, 2
      %v918 = vrot.slane %v855, 2
      %v919 = vsel %vm898, %v917, %v918
      %v920 = vrot.slane %v856, 2
      %v921 = vrot.slane %v857, 2
      %v922 = vsel %vm898, %v920, %v921
      %v923 = vld [vmem:[%s833] sm:$0xff]
      %v924 = vld [vmem:[%s833 + $0x8] sm:$0x3]
      %v925 = vld [vmem:[%s833 + $0x10] sm:$0xff]
      %v926 = vld [vmem:[%s833 + $0x18] sm:$0x3]
      %v927 = vld [vmem:[%s833 + $0x20] sm:$0xff]
      %v928 = vld [vmem:[%s833 + $0x28] sm:$0x3]
      %v929 = vld [vmem:[%s833 + $0x30] sm:$0xff]
      %v930 = vld [vmem:[%s833 + $0x38] sm:$0x3]
      %v931 = vld [vmem:[%s833 + $0x40] sm:$0xff]
      %v932 = vld [vmem:[%s833 + $0x48] sm:$0x3]
      %v933 = vld [vmem:[%s833 + $0x50] sm:$0xff]
      %v934 = vld [vmem:[%s833 + $0x58] sm:$0x3]
      %v935 = vld [vmem:[%s833 + $0x60] sm:$0xff]
      %v936 = vld [vmem:[%s833 + $0x68] sm:$0x3]
      %v937 = vld [vmem:[%s833 + $0x70] sm:$0xff]
      %v938 = vld [vmem:[%s833 + $0x78] sm:$0x3]
      %v955 = vrot.slane %v923, 1
      %v956 = vrot.slane %v924, 1
      %v957 = vsel %vm342, %v955, %v956
      %v958 = vrot.slane %v925, 1
      %v959 = vrot.slane %v926, 1
      %v960 = vsel %vm342, %v958, %v959
      %v961 = vrot.slane %v927, 1
      %v962 = vrot.slane %v928, 1
      %v963 = vsel %vm342, %v961, %v962
      %v964 = vrot.slane %v929, 1
      %v965 = vrot.slane %v930, 1
      %v966 = vsel %vm342, %v964, %v965
      %v967 = vrot.slane %v931, 1
      %v968 = vrot.slane %v932, 1
      %v969 = vsel %vm342, %v967, %v968
      %v970 = vrot.slane %v933, 1
      %v971 = vrot.slane %v934, 1
      %v972 = vsel %vm342, %v970, %v971
      %v973 = vrot.slane %v935, 1
      %v974 = vrot.slane %v936, 1
      %v975 = vsel %vm342, %v973, %v974
      %v976 = vrot.slane %v937, 1
      %v977 = vrot.slane %v938, 1
      %v978 = vsel %vm342, %v976, %v977
      %v979 = vrot.slane %v923, 2
      %v980 = vrot.slane %v924, 2
      %v981 = vsel %vm898, %v979, %v980
      %v982 = vrot.slane %v925, 2
      %v983 = vrot.slane %v926, 2
      %v984 = vsel %vm898, %v982, %v983
      %v985 = vrot.slane %v927, 2
      %v986 = vrot.slane %v928, 2
      %v987 = vsel %vm898, %v985, %v986
      %v988 = vrot.slane %v929, 2
      %v989 = vrot.slane %v930, 2
      %v990 = vsel %vm898, %v988, %v989
      %v991 = vrot.slane %v931, 2
      %v992 = vrot.slane %v932, 2
      %v993 = vsel %vm898, %v991, %v992
      %v994 = vrot.slane %v933, 2
      %v995 = vrot.slane %v934, 2
      %v996 = vsel %vm898, %v994, %v995
      %v997 = vrot.slane %v935, 2
      %v998 = vrot.slane %v936, 2
      %v999 = vsel %vm898, %v997, %v998
      %v1000 = vrot.slane %v937, 2
      %v1001 = vrot.slane %v938, 2
      %v1002 = vsel %vm898, %v1000, %v1001
      %s1003 = scalar_lea.vmem [#allocation3], 32
      %v1004 = vld [vmem:[%s1003] sm:$0xff]
      %v1005 = vld [vmem:[%s1003 + $0x8] sm:$0x3]
      %v1006 = vld [vmem:[%s1003 + $0x10] sm:$0xff]
      %v1007 = vld [vmem:[%s1003 + $0x18] sm:$0x3]
      %v1008 = vld [vmem:[%s1003 + $0x20] sm:$0xff]
      %v1009 = vld [vmem:[%s1003 + $0x28] sm:$0x3]
      %v1010 = vld [vmem:[%s1003 + $0x30] sm:$0xff]
      %v1011 = vld [vmem:[%s1003 + $0x38] sm:$0x3]
      %v1012 = vld [vmem:[%s1003 + $0x40] sm:$0xff]
      %v1013 = vld [vmem:[%s1003 + $0x48] sm:$0x3]
      %v1014 = vld [vmem:[%s1003 + $0x50] sm:$0xff]
      %v1015 = vld [vmem:[%s1003 + $0x58] sm:$0x3]
      %v1016 = vld [vmem:[%s1003 + $0x60] sm:$0xff]
      %v1017 = vld [vmem:[%s1003 + $0x68] sm:$0x3]
      %v1018 = vld [vmem:[%s1003 + $0x70] sm:$0xff]
      %v1019 = vld [vmem:[%s1003 + $0x78] sm:$0x3]
      %v1036 = vrot.slane %v1004, 1
      %v1037 = vrot.slane %v1005, 1
      %v1038 = vsel %vm342, %v1036, %v1037
      %v1039 = vrot.slane %v1006, 1
      %v1040 = vrot.slane %v1007, 1
      %v1041 = vsel %vm342, %v1039, %v1040
      %v1042 = vrot.slane %v1008, 1
      %v1043 = vrot.slane %v1009, 1
      %v1044 = vsel %vm342, %v1042, %v1043
      %v1045 = vrot.slane %v1010, 1
      %v1046 = vrot.slane %v1011, 1
      %v1047 = vsel %vm342, %v1045, %v1046
      %v1048 = vrot.slane %v1012, 1
      %v1049 = vrot.slane %v1013, 1
      %v1050 = vsel %vm342, %v1048, %v1049
      %v1051 = vrot.slane %v1014, 1
      %v1052 = vrot.slane %v1015, 1
      %v1053 = vsel %vm342, %v1051, %v1052
      %v1054 = vrot.slane %v1016, 1
      %v1055 = vrot.slane %v1017, 1
      %v1056 = vsel %vm342, %v1054, %v1055
      %v1057 = vrot.slane %v1018, 1
      %v1058 = vrot.slane %v1019, 1
      %v1059 = vsel %vm342, %v1057, %v1058
      %v1060 = vrot.slane %v1004, 2
      %v1061 = vrot.slane %v1005, 2
      %v1062 = vsel %vm898, %v1060, %v1061
      %v1063 = vrot.slane %v1006, 2
      %v1064 = vrot.slane %v1007, 2
      %v1065 = vsel %vm898, %v1063, %v1064
      %v1066 = vrot.slane %v1008, 2
      %v1067 = vrot.slane %v1009, 2
      %v1068 = vsel %vm898, %v1066, %v1067
      %v1069 = vrot.slane %v1010, 2
      %v1070 = vrot.slane %v1011, 2
      %v1071 = vsel %vm898, %v1069, %v1070
      %v1072 = vrot.slane %v1012, 2
      %v1073 = vrot.slane %v1013, 2
      %v1074 = vsel %vm898, %v1072, %v1073
      %v1075 = vrot.slane %v1014, 2
      %v1076 = vrot.slane %v1015, 2
      %v1077 = vsel %vm898, %v1075, %v1076
      %v1078 = vrot.slane %v1016, 2
      %v1079 = vrot.slane %v1017, 2
      %v1080 = vsel %vm898, %v1078, %v1079
      %v1081 = vrot.slane %v1018, 2
      %v1082 = vrot.slane %v1019, 2
      %v1083 = vsel %vm898, %v1081, %v1082
      %1084 = vrot.lane.b32.xlu0 %v876, 8
      %v1085 = vpop.permute.xlu0 %1084
      %1086 = vrot.lane.b32.xlu0 %v879, 8
      %v1087 = vpop.permute.xlu0 %1086
      %1088 = vrot.lane.b32.xlu0 %v882, 8
      %v1089 = vpop.permute.xlu0 %1088
      %1090 = vrot.lane.b32.xlu0 %v885, 8
      %v1091 = vpop.permute.xlu0 %1090
      %1092 = vrot.lane.b32.xlu0 %v888, 8
      %v1093 = vpop.permute.xlu0 %1092
      %1094 = vrot.lane.b32.xlu0 %v891, 8
      %v1095 = vpop.permute.xlu0 %1094
      %1096 = vrot.lane.b32.xlu0 %v894, 8
      %v1097 = vpop.permute.xlu0 %1096
      %1098 = vrot.lane.b32.xlu0 %v897, 8
      %v1099 = vpop.permute.xlu0 %1098
      %1108 = vrot.lane.b32.xlu0 %v901, 16
      %v1109 = vpop.permute.xlu0 %1108
      %1110 = vrot.lane.b32.xlu0 %v904, 16
      %v1111 = vpop.permute.xlu0 %1110
      %1112 = vrot.lane.b32.xlu0 %v907, 16
      %v1113 = vpop.permute.xlu0 %1112
      %1114 = vrot.lane.b32.xlu0 %v910, 16
      %v1115 = vpop.permute.xlu0 %1114
      %1116 = vrot.lane.b32.xlu0 %v913, 16
      %v1117 = vpop.permute.xlu0 %1116
      %1118 = vrot.lane.b32.xlu0 %v916, 16
      %v1119 = vpop.permute.xlu0 %1118
      %1120 = vrot.lane.b32.xlu0 %v919, 16
      %v1121 = vpop.permute.xlu0 %1120
      %1122 = vrot.lane.b32.xlu0 %v922, 16
      %v1123 = vpop.permute.xlu0 %1122
      %1132 = vrot.lane.b32.xlu0 %v923, 24
      %v1133 = vpop.permute.xlu0 %1132
      %1134 = vrot.lane.b32.xlu0 %v925, 24
      %v1135 = vpop.permute.xlu0 %1134
      %1136 = vrot.lane.b32.xlu0 %v927, 24
      %v1137 = vpop.permute.xlu0 %1136
      %1138 = vrot.lane.b32.xlu0 %v929, 24
      %v1139 = vpop.permute.xlu0 %1138
      %1140 = vrot.lane.b32.xlu0 %v931, 24
      %v1141 = vpop.permute.xlu0 %1140
      %1142 = vrot.lane.b32.xlu0 %v933, 24
      %v1143 = vpop.permute.xlu0 %1142
      %1144 = vrot.lane.b32.xlu0 %v935, 24
      %v1145 = vpop.permute.xlu0 %1144
      %1146 = vrot.lane.b32.xlu0 %v937, 24
      %v1147 = vpop.permute.xlu0 %1146
      %1156 = vrot.lane.b32.xlu0 %v957, 32
      %v1157 = vpop.permute.xlu0 %1156
      %1158 = vrot.lane.b32.xlu0 %v960, 32
      %v1159 = vpop.permute.xlu0 %1158
      %1160 = vrot.lane.b32.xlu0 %v963, 32
      %v1161 = vpop.permute.xlu0 %1160
      %1162 = vrot.lane.b32.xlu0 %v966, 32
      %v1163 = vpop.permute.xlu0 %1162
      %1164 = vrot.lane.b32.xlu0 %v969, 32
      %v1165 = vpop.permute.xlu0 %1164
      %1166 = vrot.lane.b32.xlu0 %v972, 32
      %v1167 = vpop.permute.xlu0 %1166
      %1168 = vrot.lane.b32.xlu0 %v975, 32
      %v1169 = vpop.permute.xlu0 %1168
      %1170 = vrot.lane.b32.xlu0 %v978, 32
      %v1171 = vpop.permute.xlu0 %1170
      %1180 = vrot.lane.b32.xlu0 %v981, 40
      %v1181 = vpop.permute.xlu0 %1180
      %1182 = vrot.lane.b32.xlu0 %v984, 40
      %v1183 = vpop.permute.xlu0 %1182
      %1184 = vrot.lane.b32.xlu0 %v987, 40
      %v1185 = vpop.permute.xlu0 %1184
      %1186 = vrot.lane.b32.xlu0 %v990, 40
      %v1187 = vpop.permute.xlu0 %1186
      %1188 = vrot.lane.b32.xlu0 %v993, 40
      %v1189 = vpop.permute.xlu0 %1188
      %1190 = vrot.lane.b32.xlu0 %v996, 40
      %v1191 = vpop.permute.xlu0 %1190
      %1192 = vrot.lane.b32.xlu0 %v999, 40
      %v1193 = vpop.permute.xlu0 %1192
      %1194 = vrot.lane.b32.xlu0 %v1002, 40
      %v1195 = vpop.permute.xlu0 %1194
      %1204 = vrot.lane.b32.xlu0 %v1004, 48
      %v1205 = vpop.permute.xlu0 %1204
      %1206 = vrot.lane.b32.xlu0 %v1006, 48
      %v1207 = vpop.permute.xlu0 %1206
      %1208 = vrot.lane.b32.xlu0 %v1008, 48
      %v1209 = vpop.permute.xlu0 %1208
      %1210 = vrot.lane.b32.xlu0 %v1010, 48
      %v1211 = vpop.permute.xlu0 %1210
      %1212 = vrot.lane.b32.xlu0 %v1012, 48
      %v1213 = vpop.permute.xlu0 %1212
      %1214 = vrot.lane.b32.xlu0 %v1014, 48
      %v1215 = vpop.permute.xlu0 %1214
      %1216 = vrot.lane.b32.xlu0 %v1016, 48
      %v1217 = vpop.permute.xlu0 %1216
      %1218 = vrot.lane.b32.xlu0 %v1018, 48
      %v1219 = vpop.permute.xlu0 %1218
      %1228 = vrot.lane.b32.xlu0 %v1038, 56
      %v1229 = vpop.permute.xlu0 %1228
      %1230 = vrot.lane.b32.xlu0 %v1041, 56
      %v1231 = vpop.permute.xlu0 %1230
      %1232 = vrot.lane.b32.xlu0 %v1044, 56
      %v1233 = vpop.permute.xlu0 %1232
      %1234 = vrot.lane.b32.xlu0 %v1047, 56
      %v1235 = vpop.permute.xlu0 %1234
      %1236 = vrot.lane.b32.xlu0 %v1050, 56
      %v1237 = vpop.permute.xlu0 %1236
      %1238 = vrot.lane.b32.xlu0 %v1053, 56
      %v1239 = vpop.permute.xlu0 %1238
      %1240 = vrot.lane.b32.xlu0 %v1056, 56
      %v1241 = vpop.permute.xlu0 %1240
      %1242 = vrot.lane.b32.xlu0 %v1059, 56
      %v1243 = vpop.permute.xlu0 %1242
      %1252 = vrot.lane.b32.xlu0 %v1062, 64
      %v1253 = vpop.permute.xlu0 %1252
      %1254 = vrot.lane.b32.xlu0 %v1065, 64
      %v1255 = vpop.permute.xlu0 %1254
      %1256 = vrot.lane.b32.xlu0 %v1068, 64
      %v1257 = vpop.permute.xlu0 %1256
      %1258 = vrot.lane.b32.xlu0 %v1071, 64
      %v1259 = vpop.permute.xlu0 %1258
      %1260 = vrot.lane.b32.xlu0 %v1074, 64
      %v1261 = vpop.permute.xlu0 %1260
      %1262 = vrot.lane.b32.xlu0 %v1077, 64
      %v1263 = vpop.permute.xlu0 %1262
      %1264 = vrot.lane.b32.xlu0 %v1080, 64
      %v1265 = vpop.permute.xlu0 %1264
      %1266 = vrot.lane.b32.xlu0 %v1083, 64
      %v1267 = vpop.permute.xlu0 %1266
      %v1276 = vsel %vm224, %v842, %v1085
      %v1277 = vsel %vm224, %v844, %v1087
      %v1278 = vsel %vm224, %v846, %v1089
      %v1279 = vsel %vm224, %v848, %v1091
      %v1280 = vsel %vm224, %v850, %v1093
      %v1281 = vsel %vm224, %v852, %v1095
      %v1282 = vsel %vm224, %v854, %v1097
      %v1283 = vsel %vm224, %v856, %v1099
      %v1284 = vsel %vm650, %v1276, %v1109
      %v1285 = vsel %vm650, %v1277, %v1111
      %v1286 = vsel %vm650, %v1278, %v1113
      %v1287 = vsel %vm650, %v1279, %v1115
      %v1288 = vsel %vm650, %v1280, %v1117
      %v1289 = vsel %vm650, %v1281, %v1119
      %v1290 = vsel %vm650, %v1282, %v1121
      %v1291 = vsel %vm650, %v1283, %v1123
      %v1292 = vsel %vm668, %v1284, %v1133
      %v1293 = vsel %vm668, %v1285, %v1135
      %v1294 = vsel %vm668, %v1286, %v1137
      %v1295 = vsel %vm668, %v1287, %v1139
      %v1296 = vsel %vm668, %v1288, %v1141
      %v1297 = vsel %vm668, %v1289, %v1143
      %v1298 = vsel %vm668, %v1290, %v1145
      %v1299 = vsel %vm668, %v1291, %v1147
      %v1300 = vsel %vm686, %v1292, %v1157
      %v1301 = vsel %vm686, %v1293, %v1159
      %v1302 = vsel %vm686, %v1294, %v1161
      %v1303 = vsel %vm686, %v1295, %v1163
      %v1304 = vsel %vm686, %v1296, %v1165
      %v1305 = vsel %vm686, %v1297, %v1167
      %v1306 = vsel %vm686, %v1298, %v1169
      %v1307 = vsel %vm686, %v1299, %v1171
      %vm1308 = vcmask 326656
      %v1309 = vsel %vm1308, %v1300, %v1181
      %v1310 = vsel %vm1308, %v1301, %v1183
      %v1311 = vsel %vm1308, %v1302, %v1185
      %v1312 = vsel %vm1308, %v1303, %v1187
      %v1313 = vsel %vm1308, %v1304, %v1189
      %v1314 = vsel %vm1308, %v1305, %v1191
      %v1315 = vsel %vm1308, %v1306, %v1193
      %v1316 = vsel %vm1308, %v1307, %v1195
      %vm1317 = vcmask 392192
      %v1318 = vsel %vm1317, %v1309, %v1205
      %v1319 = vsel %vm1317, %v1310, %v1207
      %v1320 = vsel %vm1317, %v1311, %v1209
      %v1321 = vsel %vm1317, %v1312, %v1211
      %v1322 = vsel %vm1317, %v1313, %v1213
      %v1323 = vsel %vm1317, %v1314, %v1215
      %v1324 = vsel %vm1317, %v1315, %v1217
      %v1325 = vsel %vm1317, %v1316, %v1219
      %vm1326 = vcmask 457728
      %v1327 = vsel %vm1326, %v1318, %v1229
      %v1328 = vsel %vm1326, %v1319, %v1231
      %v1329 = vsel %vm1326, %v1320, %v1233
      %v1330 = vsel %vm1326, %v1321, %v1235
      %v1331 = vsel %vm1326, %v1322, %v1237
      %v1332 = vsel %vm1326, %v1323, %v1239
      %v1333 = vsel %vm1326, %v1324, %v1241
      %v1334 = vsel %vm1326, %v1325, %v1243
      %vm1335 = vcmask 523264
      %v1336 = vsel %vm1335, %v1327, %v1253
      %v1337 = vsel %vm1335, %v1328, %v1255
      %v1338 = vsel %vm1335, %v1329, %v1257
      %v1339 = vsel %vm1335, %v1330, %v1259
      %v1340 = vsel %vm1335, %v1331, %v1261
      %v1341 = vsel %vm1335, %v1332, %v1263
      %v1342 = vsel %vm1335, %v1333, %v1265
      %v1343 = vsel %vm1335, %v1334, %v1267
      %v1344 = vpack.c.bf16 %v1337, %v1336
      %v1345 = vpack.c.bf16 %v1339, %v1338
      %v1346 = vpack.c.bf16 %v1341, %v1340
      %v1347 = vpack.c.bf16 %v1343, %v1342
      %v1348 = vld [vmem:[%s3] sm:$0xf]
      %v1349 = vld [vmem:[%s3 + $0x4] sm:$0xf]
      %v1350 = vld [vmem:[%s3 + $0x8] sm:$0xf]
      %v1351 = vld [vmem:[%s3 + $0xc] sm:$0xf]
      %v1352 = vld [vmem:[%s3 + $0x10] sm:$0xf]
      %v1353 = vld [vmem:[%s3 + $0x14] sm:$0xf]
      %v1354 = vld [vmem:[%s3 + $0x18] sm:$0xf]
      %v1355 = vld [vmem:[%s3 + $0x1c] sm:$0xf]
      %v1356 = vld [vmem:[%s3 + $0x20] sm:$0xf]
      %v1357 = vld [vmem:[%s4] sm:$0x1]
      %v1359 = vlaneseq
      %v1360 = vshrl.u32 %v1359, 7
      %v1361 = vsub.s32 0, %v1360
      %v1362 = vrot.slane %v1357, %v1361
      %v1373 = vunpack.c.l.b16 %v1348
      %v1374 = vunpack.c.l.b16 %v1349
      %v1375 = vunpack.c.l.b16 %v1350
      %v1376 = vunpack.c.l.b16 %v1351
      %v1377 = vunpack.c.l.b16 %v1352
      %v1378 = vunpack.c.l.b16 %v1353
      %v1379 = vunpack.c.l.b16 %v1354
      %v1380 = vunpack.c.l.b16 %v1355
      %v1381 = vunpack.c.l.b16 %v1356
      %v1382 = vpack.c.b16 %v1374, %v1373
      %v1383 = vpack.c.b16 %v1376, %v1375
      %v1384 = vpack.c.b16 %v1378, %v1377
      %v1385 = vpack.c.b16 %v1380, %v1379
      %v1386 = vpack.c.b16 %v1381, %v1381
      %vm1391 = vcmask 588800
      %v1393 = vsel %vm1391, %v1344, 0
      %v1396 = vsel %vm1391, %v1345, 0
      %v1399 = vsel %vm1391, %v1346, 0
      %v1402 = vsel %vm1391, %v1347, 0
      %vm1404 = vcmask 1043456
      %v1406 = vsel %vm1404, %v1386, 0
      %1408 = vmatprep.subr.bf16.mxu0 0
      %1409 = vmatpush1.bf16.msra.mxu0 %v1382
      %1410 = vmatprep.subr.bf16.mxu0 0
      %1411 = vmatpush1.bf16.msra.mxu0 %v1383
      %1412 = vmatprep.subr.bf16.mxu0 0
      %1413 = vmatpush1.bf16.msra.mxu0 %v1384
      %1414 = vmatprep.subr.bf16.mxu0 0
      %1415 = vmatpush1.bf16.msra.mxu0 %v1385
      %1416 = vmatprep.subr.bf16.mxu0 0
      %1417 = vmatpush1.bf16.msra.mxu0 %v1406
      %1418 = vmatprep.subr.bf16.mxu0 0
      %1419 = vmatpush1.bf16.msra.mxu0 0
      %1420 = vmatprep.subr.bf16.mxu0 0
      %1421 = vmatpush1.bf16.msra.mxu0 0
      %1422 = vmatprep.subr.bf16.mxu0 0
      %1423 = vmatpush1.bf16.msra.mxu0 0
      %1424 = vmatprep.subr.bf16.mxu0 0
      %1425 = vmatpush1.bf16.msra.mxu0 0
      %1426 = vmatprep.subr.bf16.mxu0 0
      %1427 = vmatpush1.bf16.msra.mxu0 0
      %1428 = vmatprep.subr.bf16.mxu0 0
      %1429 = vmatpush1.bf16.msra.mxu0 0
      %1430 = vmatprep.subr.bf16.mxu0 0
      %1431 = vmatpush1.bf16.msra.mxu0 0
      %1432 = vmatprep.subr.bf16.mxu0 0
      %1433 = vmatpush1.bf16.msra.mxu0 0
      %1434 = vmatprep.subr.bf16.mxu0 0
      %1435 = vmatpush1.bf16.msra.mxu0 0
      %1436 = vmatprep.subr.bf16.mxu0 0
      %1437 = vmatpush1.bf16.msra.mxu0 0
      %1438 = vmatprep.subr.bf16.mxu0 0
      %1439 = vmatpush1.bf16.msra.mxu0 0
      %1440 = vmatprep.mubr.bf16.mxu0 0
      %1441 = vmatmul.mubr.bf16.gmra.mrb[0].mxu0 %v1393
      %v1442 = vpop.f32.mrb[0].mxu0
      %v1443 = vadd.f32 %v1362, %v1442
      %v1444 = vpop.f32.mrb[0].mxu0
      %v1445 = vpop.f32.mrb[0].mxu0
      %v1446 = vadd.f32 %v1362, %v1445
      %v1447 = vpop.f32.mrb[0].mxu0
      %1448 = vmatprep.mubr.bf16.mxu0 0
      %1449 = vmatmul.mubr.bf16.gmra.mrb[0].mxu0 %v1396
      %v1450 = vpop.f32.mrb[0].mxu0
      %v1451 = vadd.f32 %v1362, %v1450
      %v1452 = vpop.f32.mrb[0].mxu0
      %v1453 = vpop.f32.mrb[0].mxu0
      %v1454 = vadd.f32 %v1362, %v1453
      %v1455 = vpop.f32.mrb[0].mxu0
      %1456 = vmatprep.mubr.bf16.mxu0 0
      %1457 = vmatmul.mubr.bf16.gmra.mrb[0].mxu0 %v1399
      %v1458 = vpop.f32.mrb[0].mxu0
      %v1459 = vadd.f32 %v1362, %v1458
      %v1460 = vpop.f32.mrb[0].mxu0
      %v1461 = vpop.f32.mrb[0].mxu0
      %v1462 = vadd.f32 %v1362, %v1461
      %v1463 = vpop.f32.mrb[0].mxu0
      %1464 = vmatprep.mubr.bf16.mxu0 0
      %1465 = vmatmul.mubr.bf16.gmra.mrb[0].mxu0 %v1402
      %v1466 = vpop.f32.mrb[0].mxu0
      %v1467 = vadd.f32 %v1362, %v1466
      %v1468 = vpop.f32.mrb[0].mxu0
      %v1469 = vpop.f32.mrb[0].mxu0
      %v1470 = vadd.f32 %v1362, %v1469
      %v1471 = vpop.f32.mrb[0].mxu0
      %1472 = vdwg.mxu0
      %1473 = vxpose.xlu0.b32.start [1/16] %v1443, 128
      %1474 = vxpose.xlu0.b32.cont [2/16] %v1446, 128
      %1475 = vxpose.xlu0.b32.cont [3/16] %v1451, 128
      %1476 = vxpose.xlu0.b32.cont [4/16] %v1454, 128
      %1477 = vxpose.xlu0.b32.cont [5/16] %v1459, 128
      %1478 = vxpose.xlu0.b32.cont [6/16] %v1462, 128
      %1479 = vxpose.xlu0.b32.cont [7/16] %v1467, 128
      %1480 = vxpose.xlu0.b32.cont [8/16] %v1470, 128
      %1481 = vxpose.xlu0.b32.cont [9/16] 0.0, 128
      %1482 = vxpose.xlu0.b32.cont [10/16] 0.0, 128
      %1483 = vxpose.xlu0.b32.cont [11/16] 0.0, 128
      %1484 = vxpose.xlu0.b32.cont [12/16] 0.0, 128
      %1485 = vxpose.xlu0.b32.cont [13/16] 0.0, 128
      %1486 = vxpose.xlu0.b32.cont [14/16] 0.0, 128
      %1487 = vxpose.xlu0.b32.cont [15/16] 0.0, 128
      %1488 = vxpose.xlu0.b32.end [16/16] 0.0, 128
      %v1489 = vpop.trf.xlu0
      %v1490 = vpop.trf.xlu0
      %v1491 = vpop.trf.xlu0
      %v1492 = vpop.trf.xlu0
      %v1493 = vpop.trf.xlu0
      %v1494 = vpop.trf.xlu0
      %v1495 = vpop.trf.xlu0
      %v1496 = vpop.trf.xlu0
      %v1497 = vpop.trf.xlu0
      %v1498 = vpop.trf.xlu0
      %v1499 = vpop.trf.xlu0
      %v1500 = vpop.trf.xlu0
      %v1501 = vpop.trf.xlu0
      %v1502 = vpop.trf.xlu0
      %v1503 = vpop.trf.xlu0
      %v1504 = vpop.trf.xlu0
      %1505 = vst.msk [vmem:[%s222] sm:$0xff] %vm1335, %v1489
      %p1506 = scmp.lt.s32.totalorder %s16, 1
      %s1507 = scalar_select %p1506, %s16, 1
      %s1508 = smul.addr %s1507, 8
      %s1509 = scalar_lea.vmem %s5, %s1508
      // Predicated region
      $region41: #{fused_conv_forward.1} parent=39 // pred_check
        %p1510 = pneg %p144
      $region42: #{fused_conv_forward.1} parent=39 // pred_check_branch
        %1512 = sbr.rel (%p1510) target = $region44
      $region43: #{fused_conv_forward.1} parent=39 // pred_region
        _
      $region44: #{fused_conv_forward.1} parent=39 // pred_fallthru
        _
    $region40: #{fused_conv_forward.1} parent=5 // pred_fallthru
      _
    %p1513 = scmp.le.s32.totalorder 2, %s11
    // Predicated region
    $region45: #{fused_conv_forward.1} parent=5 // pred_check
      %p1514 = pneg %p1513
    $region46: #{fused_conv_forward.1} parent=5 // pred_check_branch
      %1516 = sbr.rel (%p1514) target = $region48
    $region47: #{fused_conv_forward.1} parent=5 // pred_region
      %s1517 = ssub.s32 %s11, 2
      // Predicated region
      $region49: #{fused_conv_forward.1} parent=47 // pred_check
        %p1518 = pneg %p150
      $region50: #{fused_conv_forward.1} parent=47 // pred_check_branch
        %1520 = sbr.rel (%p1518) target = $region52
      $region51: #{fused_conv_forward.1} parent=47 // pred_region
        %p1521 = scmp.lt.s32.totalorder %s17, 1
        %s1522 = scalar_select %p1521, %s17, 1
        %s1523 = smul.addr %s1522, 8
        %s1524 = scalar_lea.vmem %s5, %s1523
      $region52: #{fused_conv_forward.1} parent=47 // pred_fallthru
        _
    $region48: #{fused_conv_forward.1} parent=5 // pred_fallthru
      _
  $region6: #{fused_conv_forward.1} parent=0 // loop_footer
    %s15 = sadd.s32 1, %s11
  $region7: #{fused_conv_forward.1} parent=0 // loop_footer_branch
    %10 = sbr.rel target = $region3
  $region8: #{fused_conv_forward.1} parent=0 // loop_exit
    _

</llo_original>
